<compile_context>
chip_gen: v6e
topology: v6e:2x2x1
jax: 0.10.0
libtpu: 0.0.40
codegen_flags: <defaults>
</compile_context>

<pallas_src>
import jax
import jax.numpy as jnp
from jax import lax
from jax.experimental import pallas as pl
from jax.experimental.pallas import tpu as pltpu


def _make_nonlocal_kernel(exp_in_bf16):
    def kernel(x_ref,                     # (1, N, C)  bf16, pool-phase-major rows
               wt_ref, bt_ref,            # theta conv: (C, Ci) bf16, (1, Ci) f32
               wpg_ref, bg_ref,           # fused phi|g conv: (C, 2Ci) bf16; g bias (1, Ci) f32
               ww_ref, bw_ref,            # BN-folded W conv: (Ci, C) bf16, (1, C) f32
               z_ref,                     # (1, TQ, C) bf16 output tile
               phi_t_s, g_s):             # scratch: (Ci, Ns) bf16, (Ns, Ci) bf16
        q = pl.program_id(1)
        tq = z_ref.shape[1]
        ci, ns = phi_t_s.shape

        # ---- once per batch element: project + 2x2 max-pool phi/g ----------
        @pl.when(q == 0)
        def _():
            wpg = wpg_ref[...]                          # (C, 2Ci) bf16
            pooled = None
            for k in range(4):                          # static unroll: pool phases
                xk = x_ref[0, pl.ds(k * ns, ns), :]     # (Ns, C) bf16
                pk = jnp.dot(xk, wpg, preferred_element_type=jnp.float32)
                pooled = pk if pooled is None else jnp.maximum(pooled, pk)
            # phi bias dropped (softmax is invariant to its per-row constant);
            # phi stored transposed so per-tile score matmul is MXU-native.
            phi_t_s[...] = jnp.transpose(pooled[:, :ci]).astype(phi_t_s.dtype)
            g_s[...] = (pooled[:, ci:] + bg_ref[...]).astype(g_s.dtype)

        # ---- per query tile -------------------------------------------------
        start = pl.multiple_of(q * tq, tq)
        x_tile = x_ref[0, pl.ds(start, tq), :]          # (TQ, C) bf16

        theta = jnp.dot(x_tile, wt_ref[...],
                        preferred_element_type=jnp.float32) + bt_ref[...]

        # scores f = theta @ phi^T -> (TQ, Ns); phi already (Ci, Ns) in scratch
        f = jnp.dot(theta.astype(jnp.bfloat16), phi_t_s[...],
                    preferred_element_type=jnp.float32)

        # numerically-stable softmax with deferred normalisation
        f_max = jnp.max(f, axis=-1, keepdims=True)
        if exp_in_bf16:
            # v6e/v7x: bf16 EUP path (exp is the saturating unit there)
            e = jnp.exp((f - f_max).astype(jnp.bfloat16))
            e_mm = e
            row_sum = jnp.sum(e.astype(jnp.float32), axis=-1, keepdims=True)
        else:
            # v5e: no bf16 VPU/EUP -> keep softmax math in f32
            e = jnp.exp(f - f_max)
            e_mm = e.astype(jnp.bfloat16)
            row_sum = jnp.sum(e, axis=-1, keepdims=True)

        # y = exp @ g -> (TQ, Ci), then normalise the small result only
        y = jnp.dot(e_mm, g_s[...], preferred_element_type=jnp.float32)
        y = y * pl.reciprocal(row_sum, approx=True)

        # BN-folded W (1x1 conv) + residual
        wy = jnp.dot(y.astype(jnp.bfloat16), ww_ref[...],
                     preferred_element_type=jnp.float32) + bw_ref[...]
        z_ref[0] = (wy + x_tile.astype(jnp.float32)).astype(z_ref.dtype)

    return kernel


def _pick_tq(n, target):
    """Largest multiple of 8 that divides n and is <= target (fallback: n)."""
    t = min(target, n)
    t -= t % 8
    while t >= 8:
        if n % t == 0:
            return t
        t -= 8
    return n


def _device_kind():
    try:
        return jax.devices()[0].device_kind.lower()
    except Exception:
        return ""


def nonlocal_block(x_nchw, params, tq=None):
    B, C, H, W = x_nchw.shape
    assert H % 2 == 0 and W % 2 == 0, "sub_sample=True requires even H, W"
    Ci = params["wt"].shape[1]
    N = H * W
    Ns = (H // 2) * (W // 2)

    kind = _device_kind()
    is_v7 = "v7" in kind
    use_bf16_exp = ("v6" in kind) or is_v7
    if is_v7:
        vmem_limit = 48 * 1024 * 1024        # headroom under v7x's 64 MiB VMEM
    elif any(v in kind for v in ("v4", "v5", "v6")):
        vmem_limit = 100 * 1024 * 1024       # 128 MiB parts: allow big tiles
    else:
        vmem_limit = None                    # unknown part: compiler default

    if tq is None:
        tq = 256 if is_v7 else 512
    TQ = _pick_tq(N, tq)
    NQ = N // TQ

    # single channels-last input copy, pool-phase-major row order:
    # row = k*Ns + (h'*(W//2) + w'),   k = dy*2 + dx  (offset inside 2x2 window)
    x5 = x_nchw.reshape(B, C, H // 2, 2, W // 2, 2)
    x_perm = jnp.transpose(x5, (0, 3, 5, 2, 4, 1)).reshape(B, N, C)
    x_perm = x_perm.astype(jnp.bfloat16)

    # bf16 weights for the MXU; fuse the phi/g 1x1 convs into one projection
    bf = jnp.bfloat16
    wt = params["wt"].astype(bf)
    wpg = jnp.concatenate([params["wp"], params["wg"]], axis=1).astype(bf)
    bg = params["bg"].astype(jnp.float32)              # phi bias dropped
    bt = params["bt"].astype(jnp.float32)

    # fold eval-mode BatchNorm (+ W bias) directly into the W conv weights
    eps = 1e-5
    bn_scale = params["gamma"] / jnp.sqrt(params["var"] + eps)          # (C,)
    bn_shift = params["beta"] - params["mean"] * bn_scale               # (C,)
    ww_f = (params["ww"] * bn_scale[None, :]).astype(bf)                # (Ci, C)
    bw_f = (params["bw"][0] * bn_scale + bn_shift).reshape(1, C).astype(jnp.float32)

    def full_spec(shape):
        zeros = (0,) * len(shape)
        return pl.BlockSpec(shape, lambda b, qi, z=zeros: z)

    grid_spec = pltpu.PrefetchScalarGridSpec(
        num_scalar_prefetch=0,
        grid=(B, NQ),
        in_specs=[
            # whole image resident per batch element; re-DMA'd only when b changes
            pl.BlockSpec((1, N, C), lambda b, qi: (b, 0, 0)),
            full_spec((C, Ci)), full_spec((1, Ci)),          # theta conv
            full_spec((C, 2 * Ci)), full_spec((1, Ci)),      # fused phi|g conv + g bias
            full_spec((Ci, C)), full_spec((1, C)),           # BN-folded W conv
        ],
        out_specs=pl.BlockSpec((1, TQ, C), lambda b, qi: (b, qi, 0)),
        scratch_shapes=[
            pltpu.VMEM((Ci, Ns), jnp.bfloat16),   # pooled phi, transposed
            pltpu.VMEM((Ns, Ci), jnp.bfloat16),   # pooled g
        ],
    )

    cp_kwargs = dict(dimension_semantics=("parallel", "arbitrary"))
    if vmem_limit is not None:
        cp_kwargs["vmem_limit_bytes"] = vmem_limit

    z_perm = pl.pallas_call(
        _make_nonlocal_kernel(use_bf16_exp),
        out_shape=jax.ShapeDtypeStruct((B, N, C), jnp.bfloat16),
        grid_spec=grid_spec,
        compiler_params=pltpu.CompilerParams(**cp_kwargs),
    )(x_perm, wt, bt, wpg, bg, ww_f, bw_f)

    # undo the pool-phase-major row permutation back to NCHW
    z6 = z_perm.reshape(B, 2, 2, H // 2, W // 2, C)
    z = jnp.transpose(z6, (0, 5, 3, 1, 4, 2)).reshape(B, C, H, W)
    return z.astype(x_nchw.dtype)


def reference(x, params):
    """Pure-JAX (f32) reference reproducing the PyTorch forward (eval-mode BN)."""
    B, C, H, W = x.shape
    Ci = params["wt"].shape[1]

    def conv1x1(t, w, b):  # t: (B,C,H,W), w: (Cin,Cout), b: (1,Cout)
        return jnp.einsum("bchw,co->bohw", t, w) + b[0][None, :, None, None]

    def maxpool2(t):
        b_, c_, h_, w_ = t.shape
        return jnp.max(t.reshape(b_, c_, h_ // 2, 2, w_ // 2, 2), axis=(3, 5))

    theta = conv1x1(x, params["wt"], params["bt"]).reshape(B, Ci, -1)
    theta = jnp.transpose(theta, (0, 2, 1))                       # (B, N, Ci)
    phi = maxpool2(conv1x1(x, params["wp"], params["bp"])).reshape(B, Ci, -1)
    g = maxpool2(conv1x1(x, params["wg"], params["bg"])).reshape(B, Ci, -1)
    g = jnp.transpose(g, (0, 2, 1))                               # (B, Ns, Ci)

    f = jnp.einsum("bnc,bcm->bnm", theta, phi)
    f = jax.nn.softmax(f, axis=-1)
    y = jnp.einsum("bnm,bmc->bnc", f, g)
    y = jnp.transpose(y, (0, 2, 1)).reshape(B, Ci, H, W)

    wy = conv1x1(y, params["ww"], params["bw"])
    eps = 1e-5
    scale = params["gamma"] / jnp.sqrt(params["var"] + eps)
    shift = params["beta"] - params["mean"] * scale
    wy = wy * scale[None, :, None, None] + shift[None, :, None, None]
    return wy + x


def make_params(key, in_channels, inter_channels):
    ks = jax.random.split(key, 8)
    C, Ci = in_channels, inter_channels
    f32 = jnp.float32
    return {
        # 1x1 conv weights stored as (C_in, C_out)
        "wg": 0.2 * jax.random.normal(ks[0], (C, Ci), f32),
        "bg": 0.1 * jax.random.normal(ks[1], (1, Ci), f32),
        "wt": 0.2 * jax.random.normal(ks[2], (C, Ci), f32),
        "bt": 0.1 * jax.random.normal(ks[3], (1, Ci), f32),
        "wp": 0.2 * jax.random.normal(ks[4], (C, Ci), f32),
        "bp": 0.1 * jax.random.normal(ks[5], (1, Ci), f32),
        "ww": 0.2 * jax.random.normal(ks[6], (Ci, C), f32),
        "bw": 0.1 * jax.random.normal(ks[7], (1, C), f32),
        # BatchNorm2d params (PyTorch defaults), eval mode.
        "gamma": jnp.ones((C,), f32),
        "beta": jnp.zeros((C,), f32),
        "mean": jnp.zeros((C,), f32),
        "var": jnp.ones((C,), f32),
    }


if __name__ == "__main__":
    key = jax.random.PRNGKey(0)
    kx, kp = jax.random.split(key)

    B, C, H, W = 2, 4, 16, 16          # NCHW, matches nn.Conv2d conventions
    Ci = C // 2                        # inter_channels default
    x = jax.random.normal(kx, (B, C, H, W), jnp.float32)
    params = make_params(kp, C, Ci)

    # tq=64 -> 4 query tiles per batch element, exercising the scratch-reuse path
    z = jax.block_until_ready(nonlocal_block(x, params, tq=64))
    z_ref = jax.block_until_ready(reference(x, params))

    # bf16 MXU operands, bf16 exp (v6e/v7x), bf16 output and an approximate
    # reciprocal mean the kernel is not bit-exact vs the f32 reference.
    max_err = jnp.max(jnp.abs(z.astype(jnp.float32) - z_ref))
    if not jnp.allclose(z.astype(jnp.float32), z_ref, rtol=3e-2, atol=5e-2):
        raise AssertionError(f"mismatch vs reference, max abs err = {max_err}")

    print("KERNEL_OK")
</pallas_src>

<mosaic_0001>
module attributes {stable_mosaic.version = 11 : i64} {
  func.func @kernel(%arg0: i32, %arg1: i32, %arg2: memref<1x256x4xbf16, #tpu.memory_space<vmem>>, %arg3: memref<4x2xbf16, #tpu.memory_space<vmem>>, %arg4: memref<1x2xf32, #tpu.memory_space<vmem>>, %arg5: memref<4x4xbf16, #tpu.memory_space<vmem>>, %arg6: memref<1x2xf32, #tpu.memory_space<vmem>>, %arg7: memref<2x4xbf16, #tpu.memory_space<vmem>>, %arg8: memref<1x4xf32, #tpu.memory_space<vmem>>, %arg9: memref<1x64x4xbf16, #tpu.memory_space<vmem>>, %arg10: memref<2x64xbf16, #tpu.memory_space<vmem>>, %arg11: memref<64x2xbf16, #tpu.memory_space<vmem>>) attributes {dimension_semantics = [#tpu.dimension_semantics<parallel>, #tpu.dimension_semantics<arbitrary>], iteration_bounds = array<i64: 2, 4>, scalar_prefetch = 0 : i64, scratch_operands = 2 : i64, tpu.core_type = #tpu.core_type<tc>, window_params = [{transform_indices = @transform_0, window_bounds = array<i64: 1, 256, 4>}, {pipeline_mode = #tpu.pipeline_mode<synchronous>, transform_indices = @transform_1, window_bounds = array<i64: 4, 2>}, {pipeline_mode = #tpu.pipeline_mode<synchronous>, transform_indices = @transform_2, window_bounds = array<i64: 1, 2>}, {pipeline_mode = #tpu.pipeline_mode<synchronous>, transform_indices = @transform_3, window_bounds = array<i64: 4, 4>}, {pipeline_mode = #tpu.pipeline_mode<synchronous>, transform_indices = @transform_4, window_bounds = array<i64: 1, 2>}, {pipeline_mode = #tpu.pipeline_mode<synchronous>, transform_indices = @transform_5, window_bounds = array<i64: 2, 4>}, {pipeline_mode = #tpu.pipeline_mode<synchronous>, transform_indices = @transform_6, window_bounds = array<i64: 1, 4>}, {transform_indices = @transform_7, window_bounds = array<i64: 1, 64, 4>}]} {
    %c0_i32 = arith.constant 0 : i32
    %0 = arith.cmpi eq, %arg1, %c0_i32 : i32
    %1 = arith.extui %0 : i1 to i32
    %c0_i32_0 = arith.constant 0 : i32
    %2 = arith.cmpi ne, %1, %c0_i32_0 : i32
    scf.if %2 {
      %c0_22 = arith.constant 0 : index
      %c0_23 = arith.constant 0 : index
      %41 = vector.load %arg5[%c0_22, %c0_23] : memref<4x4xbf16, #tpu.memory_space<vmem>>, vector<4x4xbf16>
      %c0_24 = arith.constant 0 : index
      %c0_25 = arith.constant 0 : index
      %c0_26 = arith.constant 0 : index
      %42 = vector.load %arg2[%c0_24, %c0_25, %c0_26] : memref<1x256x4xbf16, #tpu.memory_space<vmem>>, vector<1x64x4xbf16>
      %43 = vector.shape_cast %42 : vector<1x64x4xbf16> to vector<64x4xbf16>
      %cst_27 = arith.constant dense<0.000000e+00> : vector<64x4xf32>
      %44 = tpu.matmul %43, %41, %cst_27 {dimension_numbers = #tpu.dot_dimension_numbers<[1], [0], [0], [1], [0, 0, 1, 1], [], []>} : vector<64x4xbf16>, vector<4x4xbf16>, vector<64x4xf32> -> vector<64x4xf32>
      %c0_28 = arith.constant 0 : index
      %c64 = arith.constant 64 : index
      %c0_29 = arith.constant 0 : index
      %45 = vector.load %arg2[%c0_28, %c64, %c0_29] : memref<1x256x4xbf16, #tpu.memory_space<vmem>>, vector<1x64x4xbf16>
      %46 = vector.shape_cast %45 : vector<1x64x4xbf16> to vector<64x4xbf16>
      %cst_30 = arith.constant dense<0.000000e+00> : vector<64x4xf32>
      %47 = tpu.matmul %46, %41, %cst_30 {dimension_numbers = #tpu.dot_dimension_numbers<[1], [0], [0], [1], [0, 0, 1, 1], [], []>} : vector<64x4xbf16>, vector<4x4xbf16>, vector<64x4xf32> -> vector<64x4xf32>
      %48 = arith.maximumf %44, %47 : vector<64x4xf32>
      %c0_31 = arith.constant 0 : index
      %c128 = arith.constant 128 : index
      %c0_32 = arith.constant 0 : index
      %49 = vector.load %arg2[%c0_31, %c128, %c0_32] : memref<1x256x4xbf16, #tpu.memory_space<vmem>>, vector<1x64x4xbf16>
      %50 = vector.shape_cast %49 : vector<1x64x4xbf16> to vector<64x4xbf16>
      %cst_33 = arith.constant dense<0.000000e+00> : vector<64x4xf32>
      %51 = tpu.matmul %50, %41, %cst_33 {dimension_numbers = #tpu.dot_dimension_numbers<[1], [0], [0], [1], [0, 0, 1, 1], [], []>} : vector<64x4xbf16>, vector<4x4xbf16>, vector<64x4xf32> -> vector<64x4xf32>
      %52 = arith.maximumf %48, %51 : vector<64x4xf32>
      %c0_34 = arith.constant 0 : index
      %c192 = arith.constant 192 : index
      %c0_35 = arith.constant 0 : index
      %53 = vector.load %arg2[%c0_34, %c192, %c0_35] : memref<1x256x4xbf16, #tpu.memory_space<vmem>>, vector<1x64x4xbf16>
      %54 = vector.shape_cast %53 : vector<1x64x4xbf16> to vector<64x4xbf16>
      %cst_36 = arith.constant dense<0.000000e+00> : vector<64x4xf32>
      %55 = tpu.matmul %54, %41, %cst_36 {dimension_numbers = #tpu.dot_dimension_numbers<[1], [0], [0], [1], [0, 0, 1, 1], [], []>} : vector<64x4xbf16>, vector<4x4xbf16>, vector<64x4xf32> -> vector<64x4xf32>
      %56 = arith.maximumf %52, %55 : vector<64x4xf32>
      %57 = vector.extract_strided_slice %56 {offsets = [0, 0], sizes = [64, 2], strides = [1, 1]} : vector<64x4xf32> to vector<64x2xf32>
      %58 = tpu.transpose %57, [1, 0] : vector<64x2xf32> -> vector<2x64xf32>
      %59 = arith.truncf %58 : vector<2x64xf32> to vector<2x64xbf16>
      %c0_37 = arith.constant 0 : index
      %c0_38 = arith.constant 0 : index
      %60 = vector.load %arg10[%c0_37, %c0_38] : memref<2x64xbf16, #tpu.memory_space<vmem>>, vector<2x64xbf16>
      tpu.vector_store %arg10[%c0_37, %c0_38], %59 {strides = array<i32>} : memref<2x64xbf16, #tpu.memory_space<vmem>>, vector<2x64xbf16>,
      %61 = vector.extract_strided_slice %56 {offsets = [0, 2], sizes = [64, 2], strides = [1, 1]} : vector<64x4xf32> to vector<64x2xf32>
      %c0_39 = arith.constant 0 : index
      %c0_40 = arith.constant 0 : index
      %62 = vector.load %arg6[%c0_39, %c0_40] : memref<1x2xf32, #tpu.memory_space<vmem>>, vector<1x2xf32>
      %63 = vector.broadcast %62 : vector<1x2xf32> to vector<64x2xf32>
      %64 = arith.addf %61, %63 : vector<64x2xf32>
      %65 = arith.truncf %64 : vector<64x2xf32> to vector<64x2xbf16>
      %c0_41 = arith.constant 0 : index
      %c0_42 = arith.constant 0 : index
      %66 = vector.load %arg11[%c0_41, %c0_42] : memref<64x2xbf16, #tpu.memory_space<vmem>>, vector<64x2xbf16>
      tpu.vector_store %arg11[%c0_41, %c0_42], %65 {strides = array<i32>} : memref<64x2xbf16, #tpu.memory_space<vmem>>, vector<64x2xbf16>,
    } else {
    }
    %c64_i32 = arith.constant 64 : i32
    %3 = arith.muli %arg1, %c64_i32 : i32
    %4 = tpu.assume_multiple %3, 64 : i32
    %c0 = arith.constant 0 : index
    %5 = arith.index_cast %4 : i32 to index
    %c0_1 = arith.constant 0 : index
    %6 = vector.load %arg2[%c0, %5, %c0_1] : memref<1x256x4xbf16, #tpu.memory_space<vmem>>, vector<1x64x4xbf16>
    %7 = vector.shape_cast %6 : vector<1x64x4xbf16> to vector<64x4xbf16>
    %c0_2 = arith.constant 0 : index
    %c0_3 = arith.constant 0 : index
    %8 = vector.load %arg3[%c0_2, %c0_3] : memref<4x2xbf16, #tpu.memory_space<vmem>>, vector<4x2xbf16>
    %cst = arith.constant dense<0.000000e+00> : vector<64x2xf32>
    %9 = tpu.matmul %7, %8, %cst {dimension_numbers = #tpu.dot_dimension_numbers<[1], [0], [0], [1], [0, 0, 1, 1], [], []>} : vector<64x4xbf16>, vector<4x2xbf16>, vector<64x2xf32> -> vector<64x2xf32>
    %c0_4 = arith.constant 0 : index
    %c0_5 = arith.constant 0 : index
    %10 = vector.load %arg4[%c0_4, %c0_5] : memref<1x2xf32, #tpu.memory_space<vmem>>, vector<1x2xf32>
    %11 = vector.broadcast %10 : vector<1x2xf32> to vector<64x2xf32>
    %12 = arith.addf %9, %11 : vector<64x2xf32>
    %13 = arith.truncf %12 : vector<64x2xf32> to vector<64x2xbf16>
    %c0_6 = arith.constant 0 : index
    %c0_7 = arith.constant 0 : index
    %14 = vector.load %arg10[%c0_6, %c0_7] : memref<2x64xbf16, #tpu.memory_space<vmem>>, vector<2x64xbf16>
    %cst_8 = arith.constant dense<0.000000e+00> : vector<64x64xf32>
    %15 = tpu.matmul %13, %14, %cst_8 {dimension_numbers = #tpu.dot_dimension_numbers<[1], [0], [0], [1], [0, 0, 1, 1], [], []>} : vector<64x2xbf16>, vector<2x64xbf16>, vector<64x64xf32> -> vector<64x64xf32>
    %cst_9 = arith.constant dense<0xFF800000> : vector<64xf32>
    %16 = vector.multi_reduction <maximumf>, %15, %cst_9 [1] : vector<64x64xf32> to vector<64xf32>
    %17 = vector.shape_cast %16 : vector<64xf32> to vector<64x1xf32>
    %18 = vector.broadcast %17 : vector<64x1xf32> to vector<64x64xf32>
    %19 = arith.subf %15, %18 : vector<64x64xf32>
    %20 = math.exp %19 : vector<64x64xf32>
    %21 = arith.truncf %20 : vector<64x64xf32> to vector<64x64xbf16>
    %cst_10 = arith.constant dense<0.000000e+00> : vector<64xf32>
    %22 = vector.multi_reduction <add>, %20, %cst_10 [1] : vector<64x64xf32> to vector<64xf32>
    %23 = vector.shape_cast %22 : vector<64xf32> to vector<64x1xf32>
    %c0_11 = arith.constant 0 : index
    %c0_12 = arith.constant 0 : index
    %24 = vector.load %arg11[%c0_11, %c0_12] : memref<64x2xbf16, #tpu.memory_space<vmem>>, vector<64x2xbf16>
    %cst_13 = arith.constant dense<0.000000e+00> : vector<64x2xf32>
    %25 = tpu.matmul %21, %24, %cst_13 {dimension_numbers = #tpu.dot_dimension_numbers<[1], [0], [0], [1], [0, 0, 1, 1], [], []>} : vector<64x64xbf16>, vector<64x2xbf16>, vector<64x2xf32> -> vector<64x2xf32>
    %26 = tpu.reciprocal %23 {approx = true} : vector<64x1xf32> -> vector<64x1xf32>
    %27 = vector.broadcast %26 : vector<64x1xf32> to vector<64x2xf32>
    %28 = arith.mulf %25, %27 : vector<64x2xf32>
    %29 = arith.truncf %28 : vector<64x2xf32> to vector<64x2xbf16>
    %c0_14 = arith.constant 0 : index
    %c0_15 = arith.constant 0 : index
    %30 = vector.load %arg7[%c0_14, %c0_15] : memref<2x4xbf16, #tpu.memory_space<vmem>>, vector<2x4xbf16>
    %cst_16 = arith.constant dense<0.000000e+00> : vector<64x4xf32>
    %31 = tpu.matmul %29, %30, %cst_16 {dimension_numbers = #tpu.dot_dimension_numbers<[1], [0], [0], [1], [0, 0, 1, 1], [], []>} : vector<64x2xbf16>, vector<2x4xbf16>, vector<64x4xf32> -> vector<64x4xf32>
    %c0_17 = arith.constant 0 : index
    %c0_18 = arith.constant 0 : index
    %32 = vector.load %arg8[%c0_17, %c0_18] : memref<1x4xf32, #tpu.memory_space<vmem>>, vector<1x4xf32>
    %33 = vector.broadcast %32 : vector<1x4xf32> to vector<64x4xf32>
    %34 = arith.addf %31, %33 : vector<64x4xf32>
    %35 = arith.extf %7 : vector<64x4xbf16> to vector<64x4xf32>
    %36 = arith.addf %34, %35 : vector<64x4xf32>
    %37 = arith.truncf %36 : vector<64x4xf32> to vector<64x4xbf16>
    %c0_19 = arith.constant 0 : index
    %c0_20 = arith.constant 0 : index
    %c0_21 = arith.constant 0 : index
    %38 = vector.load %arg9[%c0_19, %c0_20, %c0_21] : memref<1x64x4xbf16, #tpu.memory_space<vmem>>, vector<1x64x4xbf16>
    %39 = vector.shape_cast %38 : vector<1x64x4xbf16> to vector<64x4xbf16>
    %40 = vector.shape_cast %37 : vector<64x4xbf16> to vector<1x64x4xbf16>
    tpu.vector_store %arg9[%c0_19, %c0_20, %c0_21], %40 {strides = array<i32>} : memref<1x64x4xbf16, #tpu.memory_space<vmem>>, vector<1x64x4xbf16>,
    return
  }
  func.func @transform_0(%arg0: i32, %arg1: i32) -> (i32, i32, i32) {
    %c0_i32 = arith.constant 0 : i32
    %c0_i32_0 = arith.constant 0 : i32
    %c0_i32_1 = arith.constant 0 : i32
    return %arg0, %c0_i32, %c0_i32_0 : i32, i32, i32
  }
  func.func @transform_1(%arg0: i32, %arg1: i32) -> (i32, i32) {
    %c0_i32 = arith.constant 0 : i32
    %c0_i32_0 = arith.constant 0 : i32
    %c0_i32_1 = arith.constant 0 : i32
    return %c0_i32, %c0_i32_0 : i32, i32
  }
  func.func @transform_2(%arg0: i32, %arg1: i32) -> (i32, i32) {
    %c0_i32 = arith.constant 0 : i32
    %c0_i32_0 = arith.constant 0 : i32
    %c0_i32_1 = arith.constant 0 : i32
    return %c0_i32, %c0_i32_0 : i32, i32
  }
  func.func @transform_3(%arg0: i32, %arg1: i32) -> (i32, i32) {
    %c0_i32 = arith.constant 0 : i32
    %c0_i32_0 = arith.constant 0 : i32
    %c0_i32_1 = arith.constant 0 : i32
    return %c0_i32, %c0_i32_0 : i32, i32
  }
  func.func @transform_4(%arg0: i32, %arg1: i32) -> (i32, i32) {
    %c0_i32 = arith.constant 0 : i32
    %c0_i32_0 = arith.constant 0 : i32
    %c0_i32_1 = arith.constant 0 : i32
    return %c0_i32, %c0_i32_0 : i32, i32
  }
  func.func @transform_5(%arg0: i32, %arg1: i32) -> (i32, i32) {
    %c0_i32 = arith.constant 0 : i32
    %c0_i32_0 = arith.constant 0 : i32
    %c0_i32_1 = arith.constant 0 : i32
    return %c0_i32, %c0_i32_0 : i32, i32
  }
  func.func @transform_6(%arg0: i32, %arg1: i32) -> (i32, i32) {
    %c0_i32 = arith.constant 0 : i32
    %c0_i32_0 = arith.constant 0 : i32
    %c0_i32_1 = arith.constant 0 : i32
    return %c0_i32, %c0_i32_0 : i32, i32
  }
  func.func @transform_7(%arg0: i32, %arg1: i32) -> (i32, i32, i32) {
    %c0_i32 = arith.constant 0 : i32
    %c0_i32_0 = arith.constant 0 : i32
    return %arg0, %arg1, %c0_i32 : i32, i32, i32
  }
}

</mosaic_0001>

<llo_original>
// kernel: tpu_custom_call.1
$region0: #{tpu_custom_call.1}
  #allocation0 [shape = 'u32[]', space=smem, size = 0x4, offset = 0x4, fixed_abs, tag = 'smem constant byte address 0x4 - core index']
  #allocation1 [shape = 'u32[144,128]{1,0:T(1,128)}', space=vmem, size = 0x12000, scoped, tag = 'internal scratch']
  #allocation2 [shape = 'bf16[2,64]{1,0:T(2,128)(2,1)}', space=vmem, size = 0x200, scoped, tag = 'scratch operand']
  #allocation3 [shape = 'bf16[64,2]{1,0:T(8,128)(2,1)}', space=vmem, size = 0x4000, scoped, tag = 'scratch operand']
  %s0 = inlined_call_operand.vmem [shape: bf16[2,256,4], index: 0, kind: input, shape index: {}]
  %s1 = inlined_call_operand.vmem [shape: bf16[4,2], index: 1, kind: input, shape index: {}]
  %s2 = inlined_call_operand.vmem [shape: f32[1,2], index: 2, kind: input, shape index: {}]
  %s3 = inlined_call_operand.vmem [shape: bf16[4,4], index: 3, kind: input, shape index: {}]
  %s4 = inlined_call_operand.vmem [shape: f32[1,2], index: 4, kind: input, shape index: {}]
  %s5 = inlined_call_operand.vmem [shape: bf16[2,4], index: 5, kind: input, shape index: {}]
  %s6 = inlined_call_operand.vmem [shape: f32[1,4], index: 6, kind: input, shape index: {}]
  %s7 = inlined_call_operand.vmem [shape: bf16[2,256,4], index: 7, kind: output, shape index: {}]
  %s8 = sld [smem:[#allocation0]]
  $region65: #{tpu_custom_call.1} parent=0
    _
  %s10 = ssub.s32 1, %s8
  %s11 = scalar_select 0, %s10, %s8
  loop: start=0, step=1, limit=10
  $region2: #{tpu_custom_call.1} parent=0 // loop_pre_header
    _
  $region3: #{tpu_custom_call.1} parent=0 // loop_header
    %s13 = sphi 0, %s17
    %p14 = scmp.ge.s32.totalorder %s13, 10
    %s20 = sphi 0, %s32
    %s21 = sphi 0, %s28
    %s22 = sphi 0, %s20
    %s23 = sphi 0, %s21
    %s24 = sphi 0, %s22
    %s25 = sphi 0, %s23
    %s35 = sphi 0, %s37
    %s38 = sphi 0, %s35
    %s39 = sphi 0, %s38
    %s55 = sphi 0, %s39
    %s59 = sphi 0, %s59
    %s61 = sphi 0, %s59
    %s62 = sphi 0, %s61
    %s76 = sphi 0, %s62
    %s80 = sphi 0, %s80
    %s82 = sphi 0, %s80
    %s83 = sphi 0, %s82
    %s97 = sphi 0, %s83
    %s101 = sphi 0, %s101
    %s103 = sphi 0, %s101
    %s104 = sphi 0, %s103
    %s118 = sphi 0, %s104
    %s122 = sphi 0, %s122
    %s124 = sphi 0, %s122
    %s125 = sphi 0, %s124
    %s139 = sphi 0, %s125
    %s143 = sphi 0, %s143
    %s145 = sphi 0, %s143
    %s146 = sphi 0, %s145
    %s160 = sphi 0, %s146
    %s164 = sphi 0, %s164
    %s166 = sphi 0, %s164
    %s167 = sphi 0, %s166
    %s181 = sphi 0, %s167
    %s189 = sphi 0, %s191
    %s192 = sphi 0, %s189
    %s193 = sphi 0, %s192
    %s209 = sphi 0, %s193
  $region4: #{tpu_custom_call.1} parent=0 // loop_header_branch
    %16 = sbr.rel (%p14) target = $region8
  $region5: #{tpu_custom_call.1} parent=0 // loop_body
    %s18 = ssub.s32 %s13, 1
    %s19 = ssub.s32 %s13, 2
    %s26 = sadd.s32 1, %s21
    %p27 = scmp.ge.s32.totalorder %s26, 4
    %s28 = scalar_select %p27, 0, %s26
    %s29 = sadd.s32 1, %s20
    %s30 = scalar_select %p27, %s29, %s20
    %p31 = scmp.ge.s32.totalorder %s30, 2
    %s32 = scalar_select %p31, 0, %s30
    %s33 = ssub.s32 %s20, %s32
    %p34 = scmp.eq.s32.totalorder %s33, 0
    %s36 = sadd.s32 %s35, 1
    %s37 = scalar_select %p34, %s35, %s36
    %p40 = pneg %p34
    %p41 = scmp.eq.s32.totalorder %s13, 7
    %p42 = por %p40, %p41
    %p43 = scmp.ne.s32.totalorder %s35, %s38
    %p44 = scmp.eq.s32.totalorder %s13, 0
    %p45 = por %p43, %p44
    %p46 = scmp.ne.s32.totalorder %s35, %s38
    %p47 = scmp.eq.s32.totalorder %s18, 7
    %p48 = por %p46, %p47
    %p49 = scmp.ne.s32.totalorder %s38, %s39
    %p50 = scmp.eq.s32.totalorder %s18, 0
    %p51 = por %p49, %p50
    %p52 = scmp.ne.s32.totalorder %s38, %s39
    %p53 = scmp.eq.s32.totalorder %s19, 7
    %p54 = por %p52, %p53
    %p56 = scmp.ne.s32.totalorder %s39, %s55
    %p57 = scmp.eq.s32.totalorder %s19, 0
    %p58 = por %p56, %p57
    %s60 = sadd.s32 %s59, 1
    %p63 = scmp.eq.s32.totalorder %s13, 7
    %p64 = scmp.ne.s32.totalorder %s59, %s61
    %p65 = scmp.eq.s32.totalorder %s13, 0
    %p66 = por %p64, %p65
    %p67 = scmp.ne.s32.totalorder %s59, %s61
    %p68 = scmp.eq.s32.totalorder %s18, 7
    %p69 = por %p67, %p68
    %p70 = scmp.ne.s32.totalorder %s61, %s62
    %p71 = scmp.eq.s32.totalorder %s18, 0
    %p72 = por %p70, %p71
    %p73 = scmp.ne.s32.totalorder %s61, %s62
    %p74 = scmp.eq.s32.totalorder %s19, 7
    %p75 = por %p73, %p74
    %p77 = scmp.ne.s32.totalorder %s62, %s76
    %p78 = scmp.eq.s32.totalorder %s19, 0
    %p79 = por %p77, %p78
    %s81 = sadd.s32 %s80, 1
    %p84 = scmp.eq.s32.totalorder %s13, 7
    %p85 = scmp.ne.s32.totalorder %s80, %s82
    %p86 = scmp.eq.s32.totalorder %s13, 0
    %p87 = por %p85, %p86
    %p88 = scmp.ne.s32.totalorder %s80, %s82
    %p89 = scmp.eq.s32.totalorder %s18, 7
    %p90 = por %p88, %p89
    %p91 = scmp.ne.s32.totalorder %s82, %s83
    %p92 = scmp.eq.s32.totalorder %s18, 0
    %p93 = por %p91, %p92
    %p94 = scmp.ne.s32.totalorder %s82, %s83
    %p95 = scmp.eq.s32.totalorder %s19, 7
    %p96 = por %p94, %p95
    %p98 = scmp.ne.s32.totalorder %s83, %s97
    %p99 = scmp.eq.s32.totalorder %s19, 0
    %p100 = por %p98, %p99
    %s102 = sadd.s32 %s101, 1
    %p105 = scmp.eq.s32.totalorder %s13, 7
    %p106 = scmp.ne.s32.totalorder %s101, %s103
    %p107 = scmp.eq.s32.totalorder %s13, 0
    %p108 = por %p106, %p107
    %p109 = scmp.ne.s32.totalorder %s101, %s103
    %p110 = scmp.eq.s32.totalorder %s18, 7
    %p111 = por %p109, %p110
    %p112 = scmp.ne.s32.totalorder %s103, %s104
    %p113 = scmp.eq.s32.totalorder %s18, 0
    %p114 = por %p112, %p113
    %p115 = scmp.ne.s32.totalorder %s103, %s104
    %p116 = scmp.eq.s32.totalorder %s19, 7
    %p117 = por %p115, %p116
    %p119 = scmp.ne.s32.totalorder %s104, %s118
    %p120 = scmp.eq.s32.totalorder %s19, 0
    %p121 = por %p119, %p120
    %s123 = sadd.s32 %s122, 1
    %p126 = scmp.eq.s32.totalorder %s13, 7
    %p127 = scmp.ne.s32.totalorder %s122, %s124
    %p128 = scmp.eq.s32.totalorder %s13, 0
    %p129 = por %p127, %p128
    %p130 = scmp.ne.s32.totalorder %s122, %s124
    %p131 = scmp.eq.s32.totalorder %s18, 7
    %p132 = por %p130, %p131
    %p133 = scmp.ne.s32.totalorder %s124, %s125
    %p134 = scmp.eq.s32.totalorder %s18, 0
    %p135 = por %p133, %p134
    %p136 = scmp.ne.s32.totalorder %s124, %s125
    %p137 = scmp.eq.s32.totalorder %s19, 7
    %p138 = por %p136, %p137
    %p140 = scmp.ne.s32.totalorder %s125, %s139
    %p141 = scmp.eq.s32.totalorder %s19, 0
    %p142 = por %p140, %p141
    %s144 = sadd.s32 %s143, 1
    %p147 = scmp.eq.s32.totalorder %s13, 7
    %p148 = scmp.ne.s32.totalorder %s143, %s145
    %p149 = scmp.eq.s32.totalorder %s13, 0
    %p150 = por %p148, %p149
    %p151 = scmp.ne.s32.totalorder %s143, %s145
    %p152 = scmp.eq.s32.totalorder %s18, 7
    %p153 = por %p151, %p152
    %p154 = scmp.ne.s32.totalorder %s145, %s146
    %p155 = scmp.eq.s32.totalorder %s18, 0
    %p156 = por %p154, %p155
    %p157 = scmp.ne.s32.totalorder %s145, %s146
    %p158 = scmp.eq.s32.totalorder %s19, 7
    %p159 = por %p157, %p158
    %p161 = scmp.ne.s32.totalorder %s146, %s160
    %p162 = scmp.eq.s32.totalorder %s19, 0
    %p163 = por %p161, %p162
    %s165 = sadd.s32 %s164, 1
    %p168 = scmp.eq.s32.totalorder %s13, 7
    %p169 = scmp.ne.s32.totalorder %s164, %s166
    %p170 = scmp.eq.s32.totalorder %s13, 0
    %p171 = por %p169, %p170
    %p172 = scmp.ne.s32.totalorder %s164, %s166
    %p173 = scmp.eq.s32.totalorder %s18, 7
    %p174 = por %p172, %p173
    %p175 = scmp.ne.s32.totalorder %s166, %s167
    %p176 = scmp.eq.s32.totalorder %s18, 0
    %p177 = por %p175, %p176
    %p178 = scmp.ne.s32.totalorder %s166, %s167
    %p179 = scmp.eq.s32.totalorder %s19, 7
    %p180 = por %p178, %p179
    %p182 = scmp.ne.s32.totalorder %s167, %s181
    %p183 = scmp.eq.s32.totalorder %s19, 0
    %p184 = por %p182, %p183
    %s185 = ssub.s32 %s20, %s32
    %s186 = ssub.s32 %s21, %s28
    %s187 = sor.u32 %s185, %s186
    %p188 = scmp.eq.s32.totalorder %s187, 0
    %s190 = sadd.s32 %s189, 1
    %s191 = scalar_select %p188, %s189, %s190
    %p194 = pneg %p188
    %p195 = scmp.eq.s32.totalorder %s13, 7
    %p196 = por %p194, %p195
    %p197 = scmp.ne.s32.totalorder %s189, %s192
    %p198 = scmp.eq.s32.totalorder %s13, 0
    %p199 = por %p197, %p198
    %p200 = scmp.ne.s32.totalorder %s189, %s192
    %p201 = scmp.eq.s32.totalorder %s18, 7
    %p202 = por %p200, %p201
    %p203 = scmp.ne.s32.totalorder %s192, %s193
    %p204 = scmp.eq.s32.totalorder %s18, 0
    %p205 = por %p203, %p204
    %p206 = scmp.ne.s32.totalorder %s192, %s193
    %p207 = scmp.eq.s32.totalorder %s19, 7
    %p208 = por %p206, %p207
    %p210 = scmp.ne.s32.totalorder %s193, %s209
    %p211 = scmp.eq.s32.totalorder %s19, 0
    %p212 = por %p210, %p211
    %p213 = scmp.le.s32.totalorder 1, %s13
    %p214 = scmp.lt.s32.totalorder %s13, 9
    %p215 = pnand %p213, %p214
    %p216 = pneg %p215
    // Predicated region
    $region9: #{tpu_custom_call.1} parent=5 // pred_check
      _
    $region10: #{tpu_custom_call.1} parent=5 // pred_check_branch
      %218 = sbr.rel (%p215) target = $region12
    $region11: #{tpu_custom_call.1} parent=5 // pred_region
      %s219 = ssub.s32 %s13, 1
      // Predicated region
      $region13: #{tpu_custom_call.1} parent=11 // pred_check
        %p220 = pneg %p72
      $region14: #{tpu_custom_call.1} parent=11 // pred_check_branch
        %222 = sbr.rel (%p220) target = $region16
      $region15: #{tpu_custom_call.1} parent=11 // pred_region
        _
      $region16: #{tpu_custom_call.1} parent=11 // pred_fallthru
        _
      // Predicated region
      $region17: #{tpu_custom_call.1} parent=11 // pred_check
        %p223 = pneg %p93
      $region18: #{tpu_custom_call.1} parent=11 // pred_check_branch
        %225 = sbr.rel (%p223) target = $region20
      $region19: #{tpu_custom_call.1} parent=11 // pred_region
        _
      $region20: #{tpu_custom_call.1} parent=11 // pred_fallthru
        _
      // Predicated region
      $region21: #{tpu_custom_call.1} parent=11 // pred_check
        %p226 = pneg %p114
      $region22: #{tpu_custom_call.1} parent=11 // pred_check_branch
        %228 = sbr.rel (%p226) target = $region24
      $region23: #{tpu_custom_call.1} parent=11 // pred_region
        _
      $region24: #{tpu_custom_call.1} parent=11 // pred_fallthru
        _
      // Predicated region
      $region25: #{tpu_custom_call.1} parent=11 // pred_check
        %p229 = pneg %p135
      $region26: #{tpu_custom_call.1} parent=11 // pred_check_branch
        %231 = sbr.rel (%p229) target = $region28
      $region27: #{tpu_custom_call.1} parent=11 // pred_region
        _
      $region28: #{tpu_custom_call.1} parent=11 // pred_fallthru
        _
      // Predicated region
      $region29: #{tpu_custom_call.1} parent=11 // pred_check
        %p232 = pneg %p156
      $region30: #{tpu_custom_call.1} parent=11 // pred_check_branch
        %234 = sbr.rel (%p232) target = $region32
      $region31: #{tpu_custom_call.1} parent=11 // pred_region
        _
      $region32: #{tpu_custom_call.1} parent=11 // pred_fallthru
        _
      // Predicated region
      $region33: #{tpu_custom_call.1} parent=11 // pred_check
        %p235 = pneg %p177
      $region34: #{tpu_custom_call.1} parent=11 // pred_check_branch
        %237 = sbr.rel (%p235) target = $region36
      $region35: #{tpu_custom_call.1} parent=11 // pred_region
        _
      $region36: #{tpu_custom_call.1} parent=11 // pred_fallthru
        _
    $region12: #{tpu_custom_call.1} parent=5 // pred_fallthru
      _
    %p238 = scmp.lt.s32.totalorder %s13, 8
    // Predicated region
    $region37: #{tpu_custom_call.1} parent=5 // pred_check
      %p239 = pneg %p238
    $region38: #{tpu_custom_call.1} parent=5 // pred_check_branch
      %241 = sbr.rel (%p239) target = $region40
    $region39: #{tpu_custom_call.1} parent=5 // pred_region
      // Predicated region
      $region41: #{tpu_custom_call.1} parent=39 // pred_check
        %p242 = pneg %p45
      $region42: #{tpu_custom_call.1} parent=39 // pred_check_branch
        %244 = sbr.rel (%p242) target = $region44
      $region43: #{tpu_custom_call.1} parent=39 // pred_region
        %p245 = scmp.lt.s32.totalorder %s20, 1
        %s246 = scalar_select %p245, %s20, 1
        %s247 = smul.addr %s246, 32
        %s248 = smul.addr %s247, 4
        %s249 = scalar_lea.vmem %s0, %s248
      $region44: #{tpu_custom_call.1} parent=39 // pred_fallthru
        _
    $region40: #{tpu_custom_call.1} parent=5 // pred_fallthru
      _
    %p250 = scmp.le.s32.totalorder 1, %s13
    %p251 = scmp.lt.s32.totalorder %s13, 9
    %p252 = pnand %p250, %p251
    %p253 = pneg %p252
    // Predicated region
    $region45: #{tpu_custom_call.1} parent=5 // pred_check
      _
    $region46: #{tpu_custom_call.1} parent=5 // pred_check_branch
      %255 = sbr.rel (%p252) target = $region48
    $region47: #{tpu_custom_call.1} parent=5 // pred_region
      %s256 = ssub.s32 %s13, 1
      %p257 = scmp.lt.s32.totalorder %s22, 1
      %s258 = scalar_select %p257, %s22, 1
      %s259 = smul.addr %s258, 32
      %s260 = smul.addr %s259, 4
      %s261 = scalar_lea.vmem %s0, %s260
      %p262 = pneg %p51
      %p263 = pneg %p48
      %p264 = pneg %p72
      %p265 = pneg %p69
      %p266 = pneg %p93
      %p267 = pneg %p90
      %p268 = pneg %p114
      %p269 = pneg %p111
      %p270 = pneg %p135
      %p271 = pneg %p132
      %p272 = pneg %p156
      %p273 = pneg %p153
      %p274 = pneg %p177
      %p275 = pneg %p174
      %p276 = pneg %p205
      %p277 = pneg %p202
      %s278 = smul.u32 8, %s23
      %p279 = scmp.lt.s32.totalorder %s22, 1
      %s280 = scalar_select %p279, %s22, 1
      %p281 = scmp.lt.s32.totalorder %s278, 31
      %s282 = scalar_select %p281, %s278, 31
      %s283 = smul.addr %s280, 32
      %s284 = sadd.s32 %s282, %s283
      %s285 = smul.addr %s284, 4
      %s286 = scalar_lea.vmem %s7, %s285
      %p287 = scmp.lt.s32.totalorder %s22, 1
      %s288 = scalar_select %p287, %s22, 1
      %s289 = smul.addr %s288, 32
      %s290 = smul.addr %s289, 4
      %s291 = scalar_lea.vmem %s0, %s290
      %s292 = smul.u32 8, %s23
      %p293 = scmp.lt.s32.totalorder %s22, 1
      %s294 = scalar_select %p293, %s22, 1
      %p295 = scmp.lt.s32.totalorder %s292, 31
      %s296 = scalar_select %p295, %s292, 31
      %s297 = smul.addr %s294, 32
      %s298 = sadd.s32 %s296, %s297
      %s299 = smul.addr %s298, 4
      %s300 = scalar_lea.vmem %s7, %s299
      %s301 = smul.u32 8, %s23
      %p303 = scmp.eq.s32.totalorder %s23, 0
      // Predicated region
      $region49: #{tpu_custom_call.1} parent=47 // pred_check
        %p304 = pneg %p303
      $region50: #{tpu_custom_call.1} parent=47 // pred_check_branch
        %306 = sbr.rel (%p304) target = $region52
      $region51: #{tpu_custom_call.1} parent=47 // pred_region
        %v307 = vld [vmem:[%s3] sm:$0x3]
        %v308 = vld [vmem:[%s291] sm:$0xf]
        %v309 = vld [vmem:[%s291 + $0x4] sm:$0xf]
        %v310 = vld [vmem:[%s291 + $0x8] sm:$0xf]
        %v311 = vld [vmem:[%s291 + $0xc] sm:$0xf]
        %v312 = vld [vmem:[%s291 + $0x10] sm:$0xf]
        %v313 = vld [vmem:[%s291 + $0x14] sm:$0xf]
        %v314 = vld [vmem:[%s291 + $0x18] sm:$0xf]
        %v315 = vld [vmem:[%s291 + $0x1c] sm:$0xf]
        %v324 = vunpack.c.l.b16 %v308
        %v325 = vunpack.c.l.b16 %v309
        %v326 = vunpack.c.l.b16 %v310
        %v327 = vunpack.c.l.b16 %v311
        %v328 = vunpack.c.l.b16 %v312
        %v329 = vunpack.c.l.b16 %v313
        %v330 = vunpack.c.l.b16 %v314
        %v331 = vunpack.c.l.b16 %v315
        %v332 = vpack.c.b16 %v325, %v324
        %v333 = vpack.c.b16 %v327, %v326
        %v334 = vpack.c.b16 %v329, %v328
        %v335 = vpack.c.b16 %v331, %v330
        %vm336 = vcmask 31744
        %v338 = vsel %vm336, %v332, 0
        %v341 = vsel %vm336, %v333, 0
        %v344 = vsel %vm336, %v334, 0
        %v347 = vsel %vm336, %v335, 0
        %vm349 = vcmask 1041408
        %v351 = vsel %vm349, %v307, 0
        %353 = vmatprep.subr.bf16.mxu0 0
        %354 = vmatpush1.bf16.msra.mxu0 0
        %355 = vmatprep.subr.bf16.mxu0 0
        %356 = vmatpush1.bf16.msra.mxu0 0
        %357 = vmatprep.subr.bf16.mxu0 0
        %358 = vmatpush1.bf16.msra.mxu0 0
        %359 = vmatprep.subr.bf16.mxu0 0
        %360 = vmatpush1.bf16.msra.mxu0 0
        %361 = vmatprep.subr.bf16.mxu0 0
        %362 = vmatpush1.bf16.msra.mxu0 0
        %363 = vmatprep.subr.bf16.mxu0 0
        %364 = vmatpush1.bf16.msra.mxu0 0
        %365 = vmatprep.subr.bf16.mxu0 0
        %366 = vmatpush1.bf16.msra.mxu0 0
        %367 = vmatprep.subr.bf16.mxu0 0
        %368 = vmatpush1.bf16.msra.mxu0 %v351
        %369 = vmatprep.subr.bf16.mxu0 0
        %370 = vmatpush2.bf16.msra.mxu0 0
        %371 = vmatprep.subr.bf16.mxu0 0
        %372 = vmatpush2.bf16.msra.mxu0 0
        %373 = vmatprep.subr.bf16.mxu0 0
        %374 = vmatpush2.bf16.msra.mxu0 0
        %375 = vmatprep.subr.bf16.mxu0 0
        %376 = vmatpush2.bf16.msra.mxu0 0
        %377 = vmatprep.subr.bf16.mxu0 0
        %378 = vmatpush2.bf16.msra.mxu0 0
        %379 = vmatprep.subr.bf16.mxu0 0
        %380 = vmatpush2.bf16.msra.mxu0 0
        %381 = vmatprep.subr.bf16.mxu0 0
        %382 = vmatpush2.bf16.msra.mxu0 0
        %383 = vmatprep.subr.bf16.mxu0 0
        %384 = vmatpush2.bf16.msra.mxu0 0
        %385 = vmatprep.mubr.bf16.mxu0 0
        %386 = vmatmul.mubr.bf16.gmra.mxu0 %v338
        %v387 = vpop.f32.mrf.mxu0
        %v388 = vadd.f32 0.0, %v387
        %v389 = vpop.f32.mrf.mxu0
        %v390 = vpop.f32.mrf.mxu0
        %v391 = vadd.f32 0.0, %v390
        %v392 = vpop.f32.mrf.mxu0
        %393 = vmatprep.mubr.bf16.mxu0 0
        %394 = vmatmul.mubr.bf16.gmra.mxu0 %v341
        %v395 = vpop.f32.mrf.mxu0
        %v396 = vadd.f32 0.0, %v395
        %v397 = vpop.f32.mrf.mxu0
        %v398 = vpop.f32.mrf.mxu0
        %v399 = vadd.f32 0.0, %v398
        %v400 = vpop.f32.mrf.mxu0
        %401 = vmatprep.mubr.bf16.mxu0 0
        %402 = vmatmul.mubr.bf16.gmra.mxu0 %v344
        %v403 = vpop.f32.mrf.mxu0
        %v404 = vadd.f32 0.0, %v403
        %v405 = vpop.f32.mrf.mxu0
        %v406 = vpop.f32.mrf.mxu0
        %v407 = vadd.f32 0.0, %v406
        %v408 = vpop.f32.mrf.mxu0
        %409 = vmatprep.mubr.bf16.mxu0 0
        %410 = vmatmul.mubr.bf16.gmra.mxu0 %v347
        %v411 = vpop.f32.mrf.mxu0
        %v412 = vadd.f32 0.0, %v411
        %v413 = vpop.f32.mrf.mxu0
        %v414 = vpop.f32.mrf.mxu0
        %v415 = vadd.f32 0.0, %v414
        %v416 = vpop.f32.mrf.mxu0
        %417 = vdwg.mxu0
        %v418 = vld [vmem:[%s291 + $0x20] sm:$0xf]
        %v419 = vld [vmem:[%s291 + $0x24] sm:$0xf]
        %v420 = vld [vmem:[%s291 + $0x28] sm:$0xf]
        %v421 = vld [vmem:[%s291 + $0x2c] sm:$0xf]
        %v422 = vld [vmem:[%s291 + $0x30] sm:$0xf]
        %v423 = vld [vmem:[%s291 + $0x34] sm:$0xf]
        %v424 = vld [vmem:[%s291 + $0x38] sm:$0xf]
        %v425 = vld [vmem:[%s291 + $0x3c] sm:$0xf]
        %v434 = vunpack.c.l.b16 %v418
        %v435 = vunpack.c.l.b16 %v419
        %v436 = vunpack.c.l.b16 %v420
        %v437 = vunpack.c.l.b16 %v421
        %v438 = vunpack.c.l.b16 %v422
        %v439 = vunpack.c.l.b16 %v423
        %v440 = vunpack.c.l.b16 %v424
        %v441 = vunpack.c.l.b16 %v425
        %v442 = vpack.c.b16 %v435, %v434
        %v443 = vpack.c.b16 %v437, %v436
        %v444 = vpack.c.b16 %v439, %v438
        %v445 = vpack.c.b16 %v441, %v440
        %v447 = vsel %vm336, %v442, 0
        %v450 = vsel %vm336, %v443, 0
        %v453 = vsel %vm336, %v444, 0
        %v456 = vsel %vm336, %v445, 0
        %458 = vmatprep.subr.bf16.mxu0 0
        %459 = vmatpush1.bf16.msra.mxu0 0
        %460 = vmatprep.subr.bf16.mxu0 0
        %461 = vmatpush1.bf16.msra.mxu0 0
        %462 = vmatprep.subr.bf16.mxu0 0
        %463 = vmatpush1.bf16.msra.mxu0 0
        %464 = vmatprep.subr.bf16.mxu0 0
        %465 = vmatpush1.bf16.msra.mxu0 0
        %466 = vmatprep.subr.bf16.mxu0 0
        %467 = vmatpush1.bf16.msra.mxu0 0
        %468 = vmatprep.subr.bf16.mxu0 0
        %469 = vmatpush1.bf16.msra.mxu0 0
        %470 = vmatprep.subr.bf16.mxu0 0
        %471 = vmatpush1.bf16.msra.mxu0 0
        %472 = vmatprep.subr.bf16.mxu0 0
        %473 = vmatpush1.bf16.msra.mxu0 %v351
        %474 = vmatprep.subr.bf16.mxu0 0
        %475 = vmatpush2.bf16.msra.mxu0 0
        %476 = vmatprep.subr.bf16.mxu0 0
        %477 = vmatpush2.bf16.msra.mxu0 0
        %478 = vmatprep.subr.bf16.mxu0 0
        %479 = vmatpush2.bf16.msra.mxu0 0
        %480 = vmatprep.subr.bf16.mxu0 0
        %481 = vmatpush2.bf16.msra.mxu0 0
        %482 = vmatprep.subr.bf16.mxu0 0
        %483 = vmatpush2.bf16.msra.mxu0 0
        %484 = vmatprep.subr.bf16.mxu0 0
        %485 = vmatpush2.bf16.msra.mxu0 0
        %486 = vmatprep.subr.bf16.mxu0 0
        %487 = vmatpush2.bf16.msra.mxu0 0
        %488 = vmatprep.subr.bf16.mxu0 0
        %489 = vmatpush2.bf16.msra.mxu0 0
        %490 = vmatprep.mubr.bf16.mxu0 0
        %491 = vmatmul.mubr.bf16.gmra.mxu0 %v447
        %v492 = vpop.f32.mrf.mxu0
        %v493 = vadd.f32 0.0, %v492
        %v494 = vpop.f32.mrf.mxu0
        %v495 = vpop.f32.mrf.mxu0
        %v496 = vadd.f32 0.0, %v495
        %v497 = vpop.f32.mrf.mxu0
        %498 = vmatprep.mubr.bf16.mxu0 0
        %499 = vmatmul.mubr.bf16.gmra.mxu0 %v450
        %v500 = vpop.f32.mrf.mxu0
        %v501 = vadd.f32 0.0, %v500
        %v502 = vpop.f32.mrf.mxu0
        %v503 = vpop.f32.mrf.mxu0
        %v504 = vadd.f32 0.0, %v503
        %v505 = vpop.f32.mrf.mxu0
        %506 = vmatprep.mubr.bf16.mxu0 0
        %507 = vmatmul.mubr.bf16.gmra.mxu0 %v453
        %v508 = vpop.f32.mrf.mxu0
        %v509 = vadd.f32 0.0, %v508
        %v510 = vpop.f32.mrf.mxu0
        %v511 = vpop.f32.mrf.mxu0
        %v512 = vadd.f32 0.0, %v511
        %v513 = vpop.f32.mrf.mxu0
        %514 = vmatprep.mubr.bf16.mxu0 0
        %515 = vmatmul.mubr.bf16.gmra.mxu0 %v456
        %v516 = vpop.f32.mrf.mxu0
        %v517 = vadd.f32 0.0, %v516
        %v518 = vpop.f32.mrf.mxu0
        %v519 = vpop.f32.mrf.mxu0
        %v520 = vadd.f32 0.0, %v519
        %v521 = vpop.f32.mrf.mxu0
        %522 = vdwg.mxu0
        %v523 = vmax.f32 %v388, %v493
        %v524 = vmax.f32 %v391, %v496
        %v525 = vmax.f32 %v396, %v501
        %v526 = vmax.f32 %v399, %v504
        %v527 = vmax.f32 %v404, %v509
        %v528 = vmax.f32 %v407, %v512
        %v529 = vmax.f32 %v412, %v517
        %v530 = vmax.f32 %v415, %v520
        %v531 = vld [vmem:[%s291 + $0x40] sm:$0xf]
        %v532 = vld [vmem:[%s291 + $0x44] sm:$0xf]
        %v533 = vld [vmem:[%s291 + $0x48] sm:$0xf]
        %v534 = vld [vmem:[%s291 + $0x4c] sm:$0xf]
        %v535 = vld [vmem:[%s291 + $0x50] sm:$0xf]
        %v536 = vld [vmem:[%s291 + $0x54] sm:$0xf]
        %v537 = vld [vmem:[%s291 + $0x58] sm:$0xf]
        %v538 = vld [vmem:[%s291 + $0x5c] sm:$0xf]
        %v547 = vunpack.c.l.b16 %v531
        %v548 = vunpack.c.l.b16 %v532
        %v549 = vunpack.c.l.b16 %v533
        %v550 = vunpack.c.l.b16 %v534
        %v551 = vunpack.c.l.b16 %v535
        %v552 = vunpack.c.l.b16 %v536
        %v553 = vunpack.c.l.b16 %v537
        %v554 = vunpack.c.l.b16 %v538
        %v555 = vpack.c.b16 %v548, %v547
        %v556 = vpack.c.b16 %v550, %v549
        %v557 = vpack.c.b16 %v552, %v551
        %v558 = vpack.c.b16 %v554, %v553
        %v560 = vsel %vm336, %v555, 0
        %v563 = vsel %vm336, %v556, 0
        %v566 = vsel %vm336, %v557, 0
        %v569 = vsel %vm336, %v558, 0
        %571 = vmatprep.subr.bf16.mxu0 0
        %572 = vmatpush1.bf16.msra.mxu0 0
        %573 = vmatprep.subr.bf16.mxu0 0
        %574 = vmatpush1.bf16.msra.mxu0 0
        %575 = vmatprep.subr.bf16.mxu0 0
        %576 = vmatpush1.bf16.msra.mxu0 0
        %577 = vmatprep.subr.bf16.mxu0 0
        %578 = vmatpush1.bf16.msra.mxu0 0
        %579 = vmatprep.subr.bf16.mxu0 0
        %580 = vmatpush1.bf16.msra.mxu0 0
        %581 = vmatprep.subr.bf16.mxu0 0
        %582 = vmatpush1.bf16.msra.mxu0 0
        %583 = vmatprep.subr.bf16.mxu0 0
        %584 = vmatpush1.bf16.msra.mxu0 0
        %585 = vmatprep.subr.bf16.mxu0 0
        %586 = vmatpush1.bf16.msra.mxu0 %v351
        %587 = vmatprep.subr.bf16.mxu0 0
        %588 = vmatpush2.bf16.msra.mxu0 0
        %589 = vmatprep.subr.bf16.mxu0 0
        %590 = vmatpush2.bf16.msra.mxu0 0
        %591 = vmatprep.subr.bf16.mxu0 0
        %592 = vmatpush2.bf16.msra.mxu0 0
        %593 = vmatprep.subr.bf16.mxu0 0
        %594 = vmatpush2.bf16.msra.mxu0 0
        %595 = vmatprep.subr.bf16.mxu0 0
        %596 = vmatpush2.bf16.msra.mxu0 0
        %597 = vmatprep.subr.bf16.mxu0 0
        %598 = vmatpush2.bf16.msra.mxu0 0
        %599 = vmatprep.subr.bf16.mxu0 0
        %600 = vmatpush2.bf16.msra.mxu0 0
        %601 = vmatprep.subr.bf16.mxu0 0
        %602 = vmatpush2.bf16.msra.mxu0 0
        %603 = vmatprep.mubr.bf16.mxu0 0
        %604 = vmatmul.mubr.bf16.gmra.mxu0 %v560
        %v605 = vpop.f32.mrf.mxu0
        %v606 = vadd.f32 0.0, %v605
        %v607 = vpop.f32.mrf.mxu0
        %v608 = vpop.f32.mrf.mxu0
        %v609 = vadd.f32 0.0, %v608
        %v610 = vpop.f32.mrf.mxu0
        %611 = vmatprep.mubr.bf16.mxu0 0
        %612 = vmatmul.mubr.bf16.gmra.mxu0 %v563
        %v613 = vpop.f32.mrf.mxu0
        %v614 = vadd.f32 0.0, %v613
        %v615 = vpop.f32.mrf.mxu0
        %v616 = vpop.f32.mrf.mxu0
        %v617 = vadd.f32 0.0, %v616
        %v618 = vpop.f32.mrf.mxu0
        %619 = vmatprep.mubr.bf16.mxu0 0
        %620 = vmatmul.mubr.bf16.gmra.mxu0 %v566
        %v621 = vpop.f32.mrf.mxu0
        %v622 = vadd.f32 0.0, %v621
        %v623 = vpop.f32.mrf.mxu0
        %v624 = vpop.f32.mrf.mxu0
        %v625 = vadd.f32 0.0, %v624
        %v626 = vpop.f32.mrf.mxu0
        %627 = vmatprep.mubr.bf16.mxu0 0
        %628 = vmatmul.mubr.bf16.gmra.mxu0 %v569
        %v629 = vpop.f32.mrf.mxu0
        %v630 = vadd.f32 0.0, %v629
        %v631 = vpop.f32.mrf.mxu0
        %v632 = vpop.f32.mrf.mxu0
        %v633 = vadd.f32 0.0, %v632
        %v634 = vpop.f32.mrf.mxu0
        %635 = vdwg.mxu0
        %v636 = vmax.f32 %v523, %v606
        %v637 = vmax.f32 %v524, %v609
        %v638 = vmax.f32 %v525, %v614
        %v639 = vmax.f32 %v526, %v617
        %v640 = vmax.f32 %v527, %v622
        %v641 = vmax.f32 %v528, %v625
        %v642 = vmax.f32 %v529, %v630
        %v643 = vmax.f32 %v530, %v633
        %v644 = vld [vmem:[%s291 + $0x60] sm:$0xf]
        %v645 = vld [vmem:[%s291 + $0x64] sm:$0xf]
        %v646 = vld [vmem:[%s291 + $0x68] sm:$0xf]
        %v647 = vld [vmem:[%s291 + $0x6c] sm:$0xf]
        %v648 = vld [vmem:[%s291 + $0x70] sm:$0xf]
        %v649 = vld [vmem:[%s291 + $0x74] sm:$0xf]
        %v650 = vld [vmem:[%s291 + $0x78] sm:$0xf]
        %v651 = vld [vmem:[%s291 + $0x7c] sm:$0xf]
        %v660 = vunpack.c.l.b16 %v644
        %v661 = vunpack.c.l.b16 %v645
        %v662 = vunpack.c.l.b16 %v646
        %v663 = vunpack.c.l.b16 %v647
        %v664 = vunpack.c.l.b16 %v648
        %v665 = vunpack.c.l.b16 %v649
        %v666 = vunpack.c.l.b16 %v650
        %v667 = vunpack.c.l.b16 %v651
        %v668 = vpack.c.b16 %v661, %v660
        %v669 = vpack.c.b16 %v663, %v662
        %v670 = vpack.c.b16 %v665, %v664
        %v671 = vpack.c.b16 %v667, %v666
        %v673 = vsel %vm336, %v668, 0
        %v676 = vsel %vm336, %v669, 0
        %v679 = vsel %vm336, %v670, 0
        %v682 = vsel %vm336, %v671, 0
        %684 = vmatprep.subr.bf16.mxu0 0
        %685 = vmatpush1.bf16.msra.mxu0 0
        %686 = vmatprep.subr.bf16.mxu0 0
        %687 = vmatpush1.bf16.msra.mxu0 0
        %688 = vmatprep.subr.bf16.mxu0 0
        %689 = vmatpush1.bf16.msra.mxu0 0
        %690 = vmatprep.subr.bf16.mxu0 0
        %691 = vmatpush1.bf16.msra.mxu0 0
        %692 = vmatprep.subr.bf16.mxu0 0
        %693 = vmatpush1.bf16.msra.mxu0 0
        %694 = vmatprep.subr.bf16.mxu0 0
        %695 = vmatpush1.bf16.msra.mxu0 0
        %696 = vmatprep.subr.bf16.mxu0 0
        %697 = vmatpush1.bf16.msra.mxu0 0
        %698 = vmatprep.subr.bf16.mxu0 0
        %699 = vmatpush1.bf16.msra.mxu0 %v351
        %700 = vmatprep.subr.bf16.mxu0 0
        %701 = vmatpush2.bf16.msra.mxu0 0
        %702 = vmatprep.subr.bf16.mxu0 0
        %703 = vmatpush2.bf16.msra.mxu0 0
        %704 = vmatprep.subr.bf16.mxu0 0
        %705 = vmatpush2.bf16.msra.mxu0 0
        %706 = vmatprep.subr.bf16.mxu0 0
        %707 = vmatpush2.bf16.msra.mxu0 0
        %708 = vmatprep.subr.bf16.mxu0 0
        %709 = vmatpush2.bf16.msra.mxu0 0
        %710 = vmatprep.subr.bf16.mxu0 0
        %711 = vmatpush2.bf16.msra.mxu0 0
        %712 = vmatprep.subr.bf16.mxu0 0
        %713 = vmatpush2.bf16.msra.mxu0 0
        %714 = vmatprep.subr.bf16.mxu0 0
        %715 = vmatpush2.bf16.msra.mxu0 0
        %716 = vmatprep.mubr.bf16.mxu0 0
        %717 = vmatmul.mubr.bf16.gmra.mxu0 %v673
        %v718 = vpop.f32.mrf.mxu0
        %v719 = vadd.f32 0.0, %v718
        %v720 = vpop.f32.mrf.mxu0
        %v721 = vpop.f32.mrf.mxu0
        %v722 = vadd.f32 0.0, %v721
        %v723 = vpop.f32.mrf.mxu0
        %724 = vmatprep.mubr.bf16.mxu0 0
        %725 = vmatmul.mubr.bf16.gmra.mxu0 %v676
        %v726 = vpop.f32.mrf.mxu0
        %v727 = vadd.f32 0.0, %v726
        %v728 = vpop.f32.mrf.mxu0
        %v729 = vpop.f32.mrf.mxu0
        %v730 = vadd.f32 0.0, %v729
        %v731 = vpop.f32.mrf.mxu0
        %732 = vmatprep.mubr.bf16.mxu0 0
        %733 = vmatmul.mubr.bf16.gmra.mxu0 %v679
        %v734 = vpop.f32.mrf.mxu0
        %v735 = vadd.f32 0.0, %v734
        %v736 = vpop.f32.mrf.mxu0
        %v737 = vpop.f32.mrf.mxu0
        %v738 = vadd.f32 0.0, %v737
        %v739 = vpop.f32.mrf.mxu0
        %740 = vmatprep.mubr.bf16.mxu0 0
        %741 = vmatmul.mubr.bf16.gmra.mxu0 %v682
        %v742 = vpop.f32.mrf.mxu0
        %v743 = vadd.f32 0.0, %v742
        %v744 = vpop.f32.mrf.mxu0
        %v745 = vpop.f32.mrf.mxu0
        %v746 = vadd.f32 0.0, %v745
        %v747 = vpop.f32.mrf.mxu0
        %748 = vdwg.mxu0
        %v749 = vmax.f32 %v636, %v719
        %v750 = vmax.f32 %v637, %v722
        %v751 = vmax.f32 %v638, %v727
        %v752 = vmax.f32 %v639, %v730
        %v753 = vmax.f32 %v640, %v735
        %v754 = vmax.f32 %v641, %v738
        %v755 = vmax.f32 %v642, %v743
        %v756 = vmax.f32 %v643, %v746
        %757 = vxpose.xlu0.b32.start [1/16] %v749, 128
        %758 = vxpose.xlu0.b32.cont [2/16] %v750, 128
        %759 = vxpose.xlu0.b32.cont [3/16] %v751, 128
        %760 = vxpose.xlu0.b32.cont [4/16] %v752, 128
        %761 = vxpose.xlu0.b32.cont [5/16] %v753, 128
        %762 = vxpose.xlu0.b32.cont [6/16] %v754, 128
        %763 = vxpose.xlu0.b32.cont [7/16] %v755, 128
        %764 = vxpose.xlu0.b32.cont [8/16] %v756, 128
        %765 = vxpose.xlu0.b32.cont [9/16] 0.0, 128
        %766 = vxpose.xlu0.b32.cont [10/16] 0.0, 128
        %767 = vxpose.xlu0.b32.cont [11/16] 0.0, 128
        %768 = vxpose.xlu0.b32.cont [12/16] 0.0, 128
        %769 = vxpose.xlu0.b32.cont [13/16] 0.0, 128
        %770 = vxpose.xlu0.b32.cont [14/16] 0.0, 128
        %771 = vxpose.xlu0.b32.cont [15/16] 0.0, 128
        %772 = vxpose.xlu0.b32.end [16/16] 0.0, 128
        %v773 = vpop.trf.xlu0
        %v774 = vpop.trf.xlu0
        %v775 = vpop.trf.xlu0
        %v776 = vpop.trf.xlu0
        %v777 = vpop.trf.xlu0
        %v778 = vpop.trf.xlu0
        %v779 = vpop.trf.xlu0
        %v780 = vpop.trf.xlu0
        %v781 = vpop.trf.xlu0
        %v782 = vpop.trf.xlu0
        %v783 = vpop.trf.xlu0
        %v784 = vpop.trf.xlu0
        %v785 = vpop.trf.xlu0
        %v786 = vpop.trf.xlu0
        %v787 = vpop.trf.xlu0
        %v788 = vpop.trf.xlu0
        %v789 = vpack.c.bf16 %v773, %v773
        %vm790 = vcmask 516096
        %791 = vst.msk [vmem:[#allocation2] sm:$0x1] %vm790, %v789
        %v792 = vld [vmem:[%s4] sm:$0x1]
        %v794 = vlaneseq
        %v795 = vshrl.u32 %v794, 7
        %v796 = vsub.s32 0, %v795
        %v797 = vrot.slane %v792, %v796
        %798 = vrot.lane.b32.xlu0 %v797, 2
        %v799 = vpop.permute.xlu0 %798
        %v801 = vadd.f32 %v749, %v799
        %v802 = vadd.f32 %v750, %v799
        %v803 = vadd.f32 %v751, %v799
        %v804 = vadd.f32 %v752, %v799
        %v805 = vadd.f32 %v753, %v799
        %v806 = vadd.f32 %v754, %v799
        %v807 = vadd.f32 %v755, %v799
        %v808 = vadd.f32 %v756, %v799
        %v809 = vpack.c.bf16 %v802, %v801
        %v810 = vpack.c.bf16 %v804, %v803
        %v811 = vpack.c.bf16 %v806, %v805
        %v812 = vpack.c.bf16 %v808, %v807
        %v817 = vunpack.c.l.b16 %v809
        %v818 = vunpack.c.h.b16 %v809
        %v819 = vunpack.c.l.b16 %v810
        %v820 = vunpack.c.h.b16 %v810
        %v821 = vunpack.c.l.b16 %v811
        %v822 = vunpack.c.h.b16 %v811
        %v823 = vunpack.c.l.b16 %v812
        %v824 = vunpack.c.h.b16 %v812
        %v825 = vpack.c.b16 %v817, %v817
        %v826 = vpack.c.b16 %v818, %v818
        %v827 = vpack.c.b16 %v819, %v819
        %v828 = vpack.c.b16 %v820, %v820
        %v829 = vpack.c.b16 %v821, %v821
        %v830 = vpack.c.b16 %v822, %v822
        %v831 = vpack.c.b16 %v823, %v823
        %v832 = vpack.c.b16 %v824, %v824
        %833 = vrot.lane.b32.xlu0 %v825, 126
        %v834 = vpop.permute.xlu0 %833
        %835 = vrot.lane.b32.xlu0 %v826, 126
        %v836 = vpop.permute.xlu0 %835
        %837 = vrot.lane.b32.xlu0 %v827, 126
        %v838 = vpop.permute.xlu0 %837
        %839 = vrot.lane.b32.xlu0 %v828, 126
        %v840 = vpop.permute.xlu0 %839
        %841 = vrot.lane.b32.xlu0 %v829, 126
        %v842 = vpop.permute.xlu0 %841
        %843 = vrot.lane.b32.xlu0 %v830, 126
        %v844 = vpop.permute.xlu0 %843
        %845 = vrot.lane.b32.xlu0 %v831, 126
        %v846 = vpop.permute.xlu0 %845
        %847 = vrot.lane.b32.xlu0 %v832, 126
        %v848 = vpop.permute.xlu0 %847
        %vm857 = vcmask 11264
        %858 = vst.msk [vmem:[#allocation3] sm:$0xf] %vm857, %v834
        %859 = vst.msk [vmem:[#allocation3 + $0x4] sm:$0xf] %vm857, %v836
        %860 = vst.msk [vmem:[#allocation3 + $0x8] sm:$0xf] %vm857, %v838
        %861 = vst.msk [vmem:[#allocation3 + $0xc] sm:$0xf] %vm857, %v840
        %862 = vst.msk [vmem:[#allocation3 + $0x10] sm:$0xf] %vm857, %v842
        %863 = vst.msk [vmem:[#allocation3 + $0x14] sm:$0xf] %vm857, %v844
        %864 = vst.msk [vmem:[#allocation3 + $0x18] sm:$0xf] %vm857, %v846
        %865 = vst.msk [vmem:[#allocation3 + $0x1c] sm:$0xf] %vm857, %v848
      $region52: #{tpu_custom_call.1} parent=47 // pred_fallthru
        _
      %s866 = smul.u32 %s23, 64
      %s867 = sshra.s32 %s866, 3
      %s868 = sand.u32 %s866, 7
      %s869 = smul.addr %s867, 4
      %s870 = scalar_lea.vmem %s291, %s869
      %v871 = vld [vmem:[%s870] sm:$0xf]
      %v872 = vld [vmem:[%s870 + $0x4] sm:$0xf]
      %v873 = vld [vmem:[%s870 + $0x8] sm:$0xf]
      %v874 = vld [vmem:[%s870 + $0xc] sm:$0xf]
      %v875 = vld [vmem:[%s870 + $0x10] sm:$0xf]
      %v876 = vld [vmem:[%s870 + $0x14] sm:$0xf]
      %v877 = vld [vmem:[%s870 + $0x18] sm:$0xf]
      %v878 = vld [vmem:[%s870 + $0x1c] sm:$0xf]
      %v879 = vld [vmem:[%s1] sm:$0x3]
      %v880 = vld [vmem:[%s2] sm:$0x1]
      %v882 = vlaneseq
      %v883 = vshrl.u32 %v882, 7
      %v884 = vsub.s32 0, %v883
      %v885 = vrot.slane %v880, %v884
      %v895 = vunpack.c.l.b16 %v871
      %v896 = vunpack.c.l.b16 %v872
      %v897 = vunpack.c.l.b16 %v873
      %v898 = vunpack.c.l.b16 %v874
      %v899 = vunpack.c.l.b16 %v875
      %v900 = vunpack.c.l.b16 %v876
      %v901 = vunpack.c.l.b16 %v877
      %v902 = vunpack.c.l.b16 %v878
      %v903 = vpack.c.b16 %v896, %v895
      %v904 = vpack.c.b16 %v898, %v897
      %v905 = vpack.c.b16 %v900, %v899
      %v906 = vpack.c.b16 %v902, %v901
      %vm907 = vcmask 31744
      %v909 = vsel %vm907, %v903, 0
      %v912 = vsel %vm907, %v904, 0
      %v915 = vsel %vm907, %v905, 0
      %v918 = vsel %vm907, %v906, 0
      %vm920 = vcmask 1041408
      %v922 = vsel %vm920, %v879, 0
      %924 = vmatprep.subr.bf16.mxu0 0
      %925 = vmatpush1.bf16.msra.mxu0 0
      %926 = vmatprep.subr.bf16.mxu0 0
      %927 = vmatpush1.bf16.msra.mxu0 0
      %928 = vmatprep.subr.bf16.mxu0 0
      %929 = vmatpush1.bf16.msra.mxu0 0
      %930 = vmatprep.subr.bf16.mxu0 0
      %931 = vmatpush1.bf16.msra.mxu0 0
      %932 = vmatprep.subr.bf16.mxu0 0
      %933 = vmatpush1.bf16.msra.mxu0 0
      %934 = vmatprep.subr.bf16.mxu0 0
      %935 = vmatpush1.bf16.msra.mxu0 0
      %936 = vmatprep.subr.bf16.mxu0 0
      %937 = vmatpush1.bf16.msra.mxu0 0
      %938 = vmatprep.subr.bf16.mxu0 0
      %939 = vmatpush1.bf16.msra.mxu0 %v922
      %940 = vmatprep.subr.bf16.mxu0 0
      %941 = vmatpush2.bf16.msra.mxu0 0
      %942 = vmatprep.subr.bf16.mxu0 0
      %943 = vmatpush2.bf16.msra.mxu0 0
      %944 = vmatprep.subr.bf16.mxu0 0
      %945 = vmatpush2.bf16.msra.mxu0 0
      %946 = vmatprep.subr.bf16.mxu0 0
      %947 = vmatpush2.bf16.msra.mxu0 0
      %948 = vmatprep.subr.bf16.mxu0 0
      %949 = vmatpush2.bf16.msra.mxu0 0
      %950 = vmatprep.subr.bf16.mxu0 0
      %951 = vmatpush2.bf16.msra.mxu0 0
      %952 = vmatprep.subr.bf16.mxu0 0
      %953 = vmatpush2.bf16.msra.mxu0 0
      %954 = vmatprep.subr.bf16.mxu0 0
      %955 = vmatpush2.bf16.msra.mxu0 0
      %956 = vmatprep.mubr.bf16.mxu0 0
      %957 = vmatmul.mubr.bf16.gmra.mxu0 %v909
      %v958 = vpop.f32.mrf.mxu0
      %v959 = vadd.f32 %v885, %v958
      %v960 = vpop.f32.mrf.mxu0
      %v961 = vpop.f32.mrf.mxu0
      %v962 = vadd.f32 %v885, %v961
      %v963 = vpop.f32.mrf.mxu0
      %964 = vmatprep.mubr.bf16.mxu0 0
      %965 = vmatmul.mubr.bf16.gmra.mxu0 %v912
      %v966 = vpop.f32.mrf.mxu0
      %v967 = vadd.f32 %v885, %v966
      %v968 = vpop.f32.mrf.mxu0
      %v969 = vpop.f32.mrf.mxu0
      %v970 = vadd.f32 %v885, %v969
      %v971 = vpop.f32.mrf.mxu0
      %972 = vmatprep.mubr.bf16.mxu0 0
      %973 = vmatmul.mubr.bf16.gmra.mxu0 %v915
      %v974 = vpop.f32.mrf.mxu0
      %v975 = vadd.f32 %v885, %v974
      %v976 = vpop.f32.mrf.mxu0
      %v977 = vpop.f32.mrf.mxu0
      %v978 = vadd.f32 %v885, %v977
      %v979 = vpop.f32.mrf.mxu0
      %980 = vmatprep.mubr.bf16.mxu0 0
      %981 = vmatmul.mubr.bf16.gmra.mxu0 %v918
      %v982 = vpop.f32.mrf.mxu0
      %v983 = vadd.f32 %v885, %v982
      %v984 = vpop.f32.mrf.mxu0
      %v985 = vpop.f32.mrf.mxu0
      %v986 = vadd.f32 %v885, %v985
      %v987 = vpop.f32.mrf.mxu0
      %988 = vdwg.mxu0
      %v989 = vpack.c.bf16 %v962, %v959
      %v990 = vpack.c.bf16 %v970, %v967
      %v991 = vpack.c.bf16 %v978, %v975
      %v992 = vpack.c.bf16 %v986, %v983
      %v993 = vld [vmem:[#allocation2] sm:$0x1]
      %vm994 = vcmask 15360
      %v996 = vsel %vm994, %v989, 0
      %v999 = vsel %vm994, %v990, 0
      %v1002 = vsel %vm994, %v991, 0
      %v1005 = vsel %vm994, %v992, 0
      %vm1007 = vcmask 1040384
      %v1009 = vsel %vm1007, %v993, 0
      %1011 = vmatprep.subr.bf16.mxu0 0
      %1012 = vmatpush1.bf16.msra.mxu0 0
      %1013 = vmatprep.subr.bf16.mxu0 0
      %1014 = vmatpush1.bf16.msra.mxu0 0
      %1015 = vmatprep.subr.bf16.mxu0 0
      %1016 = vmatpush1.bf16.msra.mxu0 0
      %1017 = vmatprep.subr.bf16.mxu0 0
      %1018 = vmatpush1.bf16.msra.mxu0 0
      %1019 = vmatprep.subr.bf16.mxu0 0
      %1020 = vmatpush1.bf16.msra.mxu0 0
      %1021 = vmatprep.subr.bf16.mxu0 0
      %1022 = vmatpush1.bf16.msra.mxu0 0
      %1023 = vmatprep.subr.bf16.mxu0 0
      %1024 = vmatpush1.bf16.msra.mxu0 0
      %1025 = vmatprep.subr.bf16.mxu0 0
      %1026 = vmatpush1.bf16.msra.mxu0 %v1009
      %1027 = vmatprep.subr.bf16.mxu0 0
      %1028 = vmatpush2.bf16.msra.mxu0 0
      %1029 = vmatprep.subr.bf16.mxu0 0
      %1030 = vmatpush2.bf16.msra.mxu0 0
      %1031 = vmatprep.subr.bf16.mxu0 0
      %1032 = vmatpush2.bf16.msra.mxu0 0
      %1033 = vmatprep.subr.bf16.mxu0 0
      %1034 = vmatpush2.bf16.msra.mxu0 0
      %1035 = vmatprep.subr.bf16.mxu0 0
      %1036 = vmatpush2.bf16.msra.mxu0 0
      %1037 = vmatprep.subr.bf16.mxu0 0
      %1038 = vmatpush2.bf16.msra.mxu0 0
      %1039 = vmatprep.subr.bf16.mxu0 0
      %1040 = vmatpush2.bf16.msra.mxu0 0
      %1041 = vmatprep.subr.bf16.mxu0 0
      %1042 = vmatpush2.bf16.msra.mxu0 0
      %1043 = vmatprep.mubr.bf16.mxu0 0
      %1044 = vmatmul.mubr.bf16.gmra.mxu0 %v996
      %v1045 = vpop.f32.mrf.mxu0
      %v1046 = vadd.f32 0.0, %v1045
      %v1047 = vpop.f32.mrf.mxu0
      %v1048 = vpop.f32.mrf.mxu0
      %v1049 = vadd.f32 0.0, %v1048
      %v1050 = vpop.f32.mrf.mxu0
      %1051 = vmatprep.mubr.bf16.mxu0 0
      %1052 = vmatmul.mubr.bf16.gmra.mxu0 %v999
      %v1053 = vpop.f32.mrf.mxu0
      %v1054 = vadd.f32 0.0, %v1053
      %v1055 = vpop.f32.mrf.mxu0
      %v1056 = vpop.f32.mrf.mxu0
      %v1057 = vadd.f32 0.0, %v1056
      %v1058 = vpop.f32.mrf.mxu0
      %1059 = vmatprep.mubr.bf16.mxu0 0
      %1060 = vmatmul.mubr.bf16.gmra.mxu0 %v1002
      %v1061 = vpop.f32.mrf.mxu0
      %v1062 = vadd.f32 0.0, %v1061
      %v1063 = vpop.f32.mrf.mxu0
      %v1064 = vpop.f32.mrf.mxu0
      %v1065 = vadd.f32 0.0, %v1064
      %v1066 = vpop.f32.mrf.mxu0
      %1067 = vmatprep.mubr.bf16.mxu0 0
      %1068 = vmatmul.mubr.bf16.gmra.mxu0 %v1005
      %v1069 = vpop.f32.mrf.mxu0
      %v1070 = vadd.f32 0.0, %v1069
      %v1071 = vpop.f32.mrf.mxu0
      %v1072 = vpop.f32.mrf.mxu0
      %v1073 = vadd.f32 0.0, %v1072
      %v1074 = vpop.f32.mrf.mxu0
      %1075 = vdwg.mxu0
      %vm1076 = vcmask 523264
      %v1077 = vsel %vm1076, %v1046, -inf
      %1078 = vmax.xlane.f32.xlu0 %v1077
      %v1079 = vpop.xlane.xlu0 %1078
      %v1080 = vsel %vm1076, %v1049, -inf
      %1081 = vmax.xlane.f32.xlu0 %v1080
      %v1082 = vpop.xlane.xlu0 %1081
      %v1083 = vsel %vm1076, %v1054, -inf
      %1084 = vmax.xlane.f32.xlu0 %v1083
      %v1085 = vpop.xlane.xlu0 %1084
      %v1086 = vsel %vm1076, %v1057, -inf
      %1087 = vmax.xlane.f32.xlu0 %v1086
      %v1088 = vpop.xlane.xlu0 %1087
      %v1089 = vsel %vm1076, %v1062, -inf
      %1090 = vmax.xlane.f32.xlu0 %v1089
      %v1091 = vpop.xlane.xlu0 %1090
      %v1092 = vsel %vm1076, %v1065, -inf
      %1093 = vmax.xlane.f32.xlu0 %v1092
      %v1094 = vpop.xlane.xlu0 %1093
      %v1095 = vsel %vm1076, %v1070, -inf
      %1096 = vmax.xlane.f32.xlu0 %v1095
      %v1097 = vpop.xlane.xlu0 %1096
      %v1098 = vsel %vm1076, %v1073, -inf
      %1099 = vmax.xlane.f32.xlu0 %v1098
      %v1100 = vpop.xlane.xlu0 %1099
      %v1101 = vsub.f32 %v1046, %v1079
      %v1102 = vsub.f32 %v1049, %v1082
      %v1103 = vsub.f32 %v1054, %v1085
      %v1104 = vsub.f32 %v1057, %v1088
      %v1105 = vsub.f32 %v1062, %v1091
      %v1106 = vsub.f32 %v1065, %v1094
      %v1107 = vsub.f32 %v1070, %v1097
      %v1108 = vsub.f32 %v1073, %v1100
      %v1109 = vmul.f32 %v1101, 1.442695
      %v1110 = vpow.pop %v1109
      %v1111 = vmul.f32 %v1102, 1.442695
      %v1112 = vpow.pop %v1111
      %v1113 = vmul.f32 %v1103, 1.442695
      %v1114 = vpow.pop %v1113
      %v1115 = vmul.f32 %v1104, 1.442695
      %v1116 = vpow.pop %v1115
      %v1117 = vmul.f32 %v1105, 1.442695
      %v1118 = vpow.pop %v1117
      %v1119 = vmul.f32 %v1106, 1.442695
      %v1120 = vpow.pop %v1119
      %v1121 = vmul.f32 %v1107, 1.442695
      %v1122 = vpow.pop %v1121
      %v1123 = vmul.f32 %v1108, 1.442695
      %v1124 = vpow.pop %v1123
      %v1125 = vpack.c.bf16 %v1112, %v1110
      %v1126 = vpack.c.bf16 %v1116, %v1114
      %v1127 = vpack.c.bf16 %v1120, %v1118
      %v1128 = vpack.c.bf16 %v1124, %v1122
      %v1129 = vsel %vm1076, %v1110, 0.0
      %1130 = vadd.xlane.f32.xlu0 %v1129
      %v1131 = vpop.xlane.xlu0 %1130
      %v1132 = vsel %vm1076, %v1112, 0.0
      %1133 = vadd.xlane.f32.xlu0 %v1132
      %v1134 = vpop.xlane.xlu0 %1133
      %v1135 = vsel %vm1076, %v1114, 0.0
      %1136 = vadd.xlane.f32.xlu0 %v1135
      %v1137 = vpop.xlane.xlu0 %1136
      %v1138 = vsel %vm1076, %v1116, 0.0
      %1139 = vadd.xlane.f32.xlu0 %v1138
      %v1140 = vpop.xlane.xlu0 %1139
      %v1141 = vsel %vm1076, %v1118, 0.0
      %1142 = vadd.xlane.f32.xlu0 %v1141
      %v1143 = vpop.xlane.xlu0 %1142
      %v1144 = vsel %vm1076, %v1120, 0.0
      %1145 = vadd.xlane.f32.xlu0 %v1144
      %v1146 = vpop.xlane.xlu0 %1145
      %v1147 = vsel %vm1076, %v1122, 0.0
      %1148 = vadd.xlane.f32.xlu0 %v1147
      %v1149 = vpop.xlane.xlu0 %1148
      %v1150 = vsel %vm1076, %v1124, 0.0
      %1151 = vadd.xlane.f32.xlu0 %v1150
      %v1152 = vpop.xlane.xlu0 %1151
      %v1153 = vld [vmem:[#allocation3] sm:$0xf]
      %v1154 = vld [vmem:[#allocation3 + $0x4] sm:$0xf]
      %v1155 = vld [vmem:[#allocation3 + $0x8] sm:$0xf]
      %v1156 = vld [vmem:[#allocation3 + $0xc] sm:$0xf]
      %v1157 = vld [vmem:[#allocation3 + $0x10] sm:$0xf]
      %v1158 = vld [vmem:[#allocation3 + $0x14] sm:$0xf]
      %v1159 = vld [vmem:[#allocation3 + $0x18] sm:$0xf]
      %v1160 = vld [vmem:[#allocation3 + $0x1c] sm:$0xf]
      %v1169 = vunpack.c.l.b16 %v1153
      %v1170 = vunpack.c.l.b16 %v1154
      %v1171 = vunpack.c.l.b16 %v1155
      %v1172 = vunpack.c.l.b16 %v1156
      %v1173 = vunpack.c.l.b16 %v1157
      %v1174 = vunpack.c.l.b16 %v1158
      %v1175 = vunpack.c.l.b16 %v1159
      %v1176 = vunpack.c.l.b16 %v1160
      %v1177 = vpack.c.b16 %v1170, %v1169
      %v1178 = vpack.c.b16 %v1172, %v1171
      %v1179 = vpack.c.b16 %v1174, %v1173
      %v1180 = vpack.c.b16 %v1176, %v1175
      %v1186 = vsel %vm1076, %v1125, 0
      %v1189 = vsel %vm1076, %v1126, 0
      %v1192 = vsel %vm1076, %v1127, 0
      %v1195 = vsel %vm1076, %v1128, 0
      %1197 = vmatprep.subr.bf16.mxu0 0
      %1198 = vmatpush1.bf16.msra.mxu0 0
      %1199 = vmatprep.subr.bf16.mxu0 0
      %1200 = vmatpush1.bf16.msra.mxu0 0
      %1201 = vmatprep.subr.bf16.mxu0 0
      %1202 = vmatpush1.bf16.msra.mxu0 0
      %1203 = vmatprep.subr.bf16.mxu0 0
      %1204 = vmatpush1.bf16.msra.mxu0 0
      %1205 = vmatprep.subr.bf16.mxu0 0
      %1206 = vmatpush1.bf16.msra.mxu0 %v1180
      %1207 = vmatprep.subr.bf16.mxu0 0
      %1208 = vmatpush1.bf16.msra.mxu0 %v1179
      %1209 = vmatprep.subr.bf16.mxu0 0
      %1210 = vmatpush1.bf16.msra.mxu0 %v1178
      %1211 = vmatprep.subr.bf16.mxu0 0
      %1212 = vmatpush1.bf16.msra.mxu0 %v1177
      %1213 = vmatprep.subr.bf16.mxu0 0
      %1214 = vmatpush2.bf16.msra.mxu0 0
      %1215 = vmatprep.subr.bf16.mxu0 0
      %1216 = vmatpush2.bf16.msra.mxu0 0
      %1217 = vmatprep.subr.bf16.mxu0 0
      %1218 = vmatpush2.bf16.msra.mxu0 0
      %1219 = vmatprep.subr.bf16.mxu0 0
      %1220 = vmatpush2.bf16.msra.mxu0 0
      %1221 = vmatprep.subr.bf16.mxu0 0
      %1222 = vmatpush2.bf16.msra.mxu0 0
      %1223 = vmatprep.subr.bf16.mxu0 0
      %1224 = vmatpush2.bf16.msra.mxu0 0
      %1225 = vmatprep.subr.bf16.mxu0 0
      %1226 = vmatpush2.bf16.msra.mxu0 0
      %1227 = vmatprep.subr.bf16.mxu0 0
      %1228 = vmatpush2.bf16.msra.mxu0 0
      %1229 = vmatprep.mubr.bf16.mxu0 0
      %1230 = vmatmul.mubr.bf16.gmra.mxu0 %v1186
      %v1231 = vpop.f32.mrf.mxu0
      %v1232 = vadd.f32 0.0, %v1231
      %v1233 = vpop.f32.mrf.mxu0
      %v1234 = vpop.f32.mrf.mxu0
      %v1235 = vadd.f32 0.0, %v1234
      %v1236 = vpop.f32.mrf.mxu0
      %1237 = vmatprep.mubr.bf16.mxu0 0
      %1238 = vmatmul.mubr.bf16.gmra.mxu0 %v1189
      %v1239 = vpop.f32.mrf.mxu0
      %v1240 = vadd.f32 0.0, %v1239
      %v1241 = vpop.f32.mrf.mxu0
      %v1242 = vpop.f32.mrf.mxu0
      %v1243 = vadd.f32 0.0, %v1242
      %v1244 = vpop.f32.mrf.mxu0
      %1245 = vmatprep.mubr.bf16.mxu0 0
      %1246 = vmatmul.mubr.bf16.gmra.mxu0 %v1192
      %v1247 = vpop.f32.mrf.mxu0
      %v1248 = vadd.f32 0.0, %v1247
      %v1249 = vpop.f32.mrf.mxu0
      %v1250 = vpop.f32.mrf.mxu0
      %v1251 = vadd.f32 0.0, %v1250
      %v1252 = vpop.f32.mrf.mxu0
      %1253 = vmatprep.mubr.bf16.mxu0 0
      %1254 = vmatmul.mubr.bf16.gmra.mxu0 %v1195
      %v1255 = vpop.f32.mrf.mxu0
      %v1256 = vadd.f32 0.0, %v1255
      %v1257 = vpop.f32.mrf.mxu0
      %v1258 = vpop.f32.mrf.mxu0
      %v1259 = vadd.f32 0.0, %v1258
      %v1260 = vpop.f32.mrf.mxu0
      %1261 = vdwg.mxu0
      %v1262 = vrcp.pop %v1131
      %v1263 = vrcp.pop %v1134
      %v1264 = vrcp.pop %v1137
      %v1265 = vrcp.pop %v1140
      %v1266 = vrcp.pop %v1143
      %v1267 = vrcp.pop %v1146
      %v1268 = vrcp.pop %v1149
      %v1269 = vrcp.pop %v1152
      %v1270 = vmul.f32 %v1232, %v1262
      %v1271 = vmul.f32 %v1235, %v1263
      %v1272 = vmul.f32 %v1240, %v1264
      %v1273 = vmul.f32 %v1243, %v1265
      %v1274 = vmul.f32 %v1248, %v1266
      %v1275 = vmul.f32 %v1251, %v1267
      %v1276 = vmul.f32 %v1256, %v1268
      %v1277 = vmul.f32 %v1259, %v1269
      %v1278 = vpack.c.bf16 %v1271, %v1270
      %v1279 = vpack.c.bf16 %v1273, %v1272
      %v1280 = vpack.c.bf16 %v1275, %v1274
      %v1281 = vpack.c.bf16 %v1277, %v1276
      %v1282 = vld [vmem:[%s5] sm:$0x1]
      %v1283 = vld [vmem:[%s6] sm:$0x1]
      %v1285 = vlaneseq
      %v1286 = vshrl.u32 %v1285, 7
      %v1287 = vsub.s32 0, %v1286
      %v1288 = vrot.slane %v1283, %v1287
      %v1291 = vsel %vm994, %v1278, 0
      %v1294 = vsel %vm994, %v1279, 0
      %v1297 = vsel %vm994, %v1280, 0
      %v1300 = vsel %vm994, %v1281, 0
      %v1303 = vsel %vm1007, %v1282, 0
      %1305 = vmatprep.subr.bf16.mxu0 0
      %1306 = vmatpush1.bf16.msra.mxu0 0
      %1307 = vmatprep.subr.bf16.mxu0 0
      %1308 = vmatpush1.bf16.msra.mxu0 0
      %1309 = vmatprep.subr.bf16.mxu0 0
      %1310 = vmatpush1.bf16.msra.mxu0 0
      %1311 = vmatprep.subr.bf16.mxu0 0
      %1312 = vmatpush1.bf16.msra.mxu0 0
      %1313 = vmatprep.subr.bf16.mxu0 0
      %1314 = vmatpush1.bf16.msra.mxu0 0
      %1315 = vmatprep.subr.bf16.mxu0 0
      %1316 = vmatpush1.bf16.msra.mxu0 0
      %1317 = vmatprep.subr.bf16.mxu0 0
      %1318 = vmatpush1.bf16.msra.mxu0 0
      %1319 = vmatprep.subr.bf16.mxu0 0
      %1320 = vmatpush1.bf16.msra.mxu0 %v1303
      %1321 = vmatprep.subr.bf16.mxu0 0
      %1322 = vmatpush2.bf16.msra.mxu0 0
      %1323 = vmatprep.subr.bf16.mxu0 0
      %1324 = vmatpush2.bf16.msra.mxu0 0
      %1325 = vmatprep.subr.bf16.mxu0 0
      %1326 = vmatpush2.bf16.msra.mxu0 0
      %1327 = vmatprep.subr.bf16.mxu0 0
      %1328 = vmatpush2.bf16.msra.mxu0 0
      %1329 = vmatprep.subr.bf16.mxu0 0
      %1330 = vmatpush2.bf16.msra.mxu0 0
      %1331 = vmatprep.subr.bf16.mxu0 0
      %1332 = vmatpush2.bf16.msra.mxu0 0
      %1333 = vmatprep.subr.bf16.mxu0 0
      %1334 = vmatpush2.bf16.msra.mxu0 0
      %1335 = vmatprep.subr.bf16.mxu0 0
      %1336 = vmatpush2.bf16.msra.mxu0 0
      %1337 = vmatprep.mubr.bf16.mxu0 0
      %1338 = vmatmul.mubr.bf16.gmra.mxu0 %v1291
      %v1339 = vpop.f32.mrf.mxu0
      %v1340 = vadd.f32 %v1288, %v1339
      %v1341 = vpop.f32.mrf.mxu0
      %v1342 = vpop.f32.mrf.mxu0
      %v1343 = vadd.f32 %v1288, %v1342
      %v1344 = vpop.f32.mrf.mxu0
      %1345 = vmatprep.mubr.bf16.mxu0 0
      %1346 = vmatmul.mubr.bf16.gmra.mxu0 %v1294
      %v1347 = vpop.f32.mrf.mxu0
      %v1348 = vadd.f32 %v1288, %v1347
      %v1349 = vpop.f32.mrf.mxu0
      %v1350 = vpop.f32.mrf.mxu0
      %v1351 = vadd.f32 %v1288, %v1350
      %v1352 = vpop.f32.mrf.mxu0
      %1353 = vmatprep.mubr.bf16.mxu0 0
      %1354 = vmatmul.mubr.bf16.gmra.mxu0 %v1297
      %v1355 = vpop.f32.mrf.mxu0
      %v1356 = vadd.f32 %v1288, %v1355
      %v1357 = vpop.f32.mrf.mxu0
      %v1358 = vpop.f32.mrf.mxu0
      %v1359 = vadd.f32 %v1288, %v1358
      %v1360 = vpop.f32.mrf.mxu0
      %1361 = vmatprep.mubr.bf16.mxu0 0
      %1362 = vmatmul.mubr.bf16.gmra.mxu0 %v1300
      %v1363 = vpop.f32.mrf.mxu0
      %v1364 = vadd.f32 %v1288, %v1363
      %v1365 = vpop.f32.mrf.mxu0
      %v1366 = vpop.f32.mrf.mxu0
      %v1367 = vadd.f32 %v1288, %v1366
      %v1368 = vpop.f32.mrf.mxu0
      %1369 = vdwg.mxu0
      %v1370 = vunpack.c.l.bf16 %v871
      %v1371 = vunpack.c.l.bf16 %v872
      %v1372 = vunpack.c.l.bf16 %v873
      %v1373 = vunpack.c.l.bf16 %v874
      %v1374 = vunpack.c.l.bf16 %v875
      %v1375 = vunpack.c.l.bf16 %v876
      %v1376 = vunpack.c.l.bf16 %v877
      %v1377 = vunpack.c.l.bf16 %v878
      %v1378 = vadd.f32 %v1340, %v1370
      %v1379 = vadd.f32 %v1343, %v1371
      %v1380 = vadd.f32 %v1348, %v1372
      %v1381 = vadd.f32 %v1351, %v1373
      %v1382 = vadd.f32 %v1356, %v1374
      %v1383 = vadd.f32 %v1359, %v1375
      %v1384 = vadd.f32 %v1364, %v1376
      %v1385 = vadd.f32 %v1367, %v1377
      %v1386 = vpack.c.bf16 %v1379, %v1378
      %v1387 = vpack.c.bf16 %v1381, %v1380
      %v1388 = vpack.c.bf16 %v1383, %v1382
      %v1389 = vpack.c.bf16 %v1385, %v1384
      %v1394 = vunpack.c.l.b16 %v1386
      %v1395 = vunpack.c.h.b16 %v1386
      %v1396 = vunpack.c.l.b16 %v1387
      %v1397 = vunpack.c.h.b16 %v1387
      %v1398 = vunpack.c.l.b16 %v1388
      %v1399 = vunpack.c.h.b16 %v1388
      %v1400 = vunpack.c.l.b16 %v1389
      %v1401 = vunpack.c.h.b16 %v1389
      %v1402 = vpack.c.b16 %v1394, %v1394
      %v1403 = vpack.c.b16 %v1395, %v1395
      %v1404 = vpack.c.b16 %v1396, %v1396
      %v1405 = vpack.c.b16 %v1397, %v1397
      %v1406 = vpack.c.b16 %v1398, %v1398
      %v1407 = vpack.c.b16 %v1399, %v1399
      %v1408 = vpack.c.b16 %v1400, %v1400
      %v1409 = vpack.c.b16 %v1401, %v1401
      %vm1418 = vcmask 27648
      %1419 = vst.msk [vmem:[%s300] sm:$0xf] %vm1418, %v1402
      %1420 = vst.msk [vmem:[%s300 + $0x4] sm:$0xf] %vm1418, %v1403
      %1421 = vst.msk [vmem:[%s300 + $0x8] sm:$0xf] %vm1418, %v1404
      %1422 = vst.msk [vmem:[%s300 + $0xc] sm:$0xf] %vm1418, %v1405
      %1423 = vst.msk [vmem:[%s300 + $0x10] sm:$0xf] %vm1418, %v1406
      %1424 = vst.msk [vmem:[%s300 + $0x14] sm:$0xf] %vm1418, %v1407
      %1425 = vst.msk [vmem:[%s300 + $0x18] sm:$0xf] %vm1418, %v1408
      %1426 = vst.msk [vmem:[%s300 + $0x1c] sm:$0xf] %vm1418, %v1409
      %s1427 = smul.u32 8, %s23
      %p1428 = scmp.lt.s32.totalorder %s22, 1
      %s1429 = scalar_select %p1428, %s22, 1
      %p1430 = scmp.lt.s32.totalorder %s1427, 31
      %s1431 = scalar_select %p1430, %s1427, 31
      %s1432 = smul.addr %s1429, 32
      %s1433 = sadd.s32 %s1431, %s1432
      %s1434 = smul.addr %s1433, 4
      %s1435 = scalar_lea.vmem %s7, %s1434
      // Predicated region
      $region53: #{tpu_custom_call.1} parent=47 // pred_check
        %p1436 = pneg %p202
      $region54: #{tpu_custom_call.1} parent=47 // pred_check_branch
        %1438 = sbr.rel (%p1436) target = $region56
      $region55: #{tpu_custom_call.1} parent=47 // pred_region
        %s1439 = smul.u32 8, %s23
      $region56: #{tpu_custom_call.1} parent=47 // pred_fallthru
        _
    $region48: #{tpu_custom_call.1} parent=5 // pred_fallthru
      _
    %p1440 = scmp.le.s32.totalorder 2, %s13
    // Predicated region
    $region57: #{tpu_custom_call.1} parent=5 // pred_check
      %p1441 = pneg %p1440
    $region58: #{tpu_custom_call.1} parent=5 // pred_check_branch
      %1443 = sbr.rel (%p1441) target = $region60
    $region59: #{tpu_custom_call.1} parent=5 // pred_region
      %s1444 = ssub.s32 %s13, 2
      // Predicated region
      $region61: #{tpu_custom_call.1} parent=59 // pred_check
        %p1445 = pneg %p208
      $region62: #{tpu_custom_call.1} parent=59 // pred_check_branch
        %1447 = sbr.rel (%p1445) target = $region64
      $region63: #{tpu_custom_call.1} parent=59 // pred_region
        %s1448 = smul.u32 8, %s25
        %p1449 = scmp.lt.s32.totalorder %s24, 1
        %s1450 = scalar_select %p1449, %s24, 1
        %p1451 = scmp.lt.s32.totalorder %s1448, 31
        %s1452 = scalar_select %p1451, %s1448, 31
        %s1453 = smul.addr %s1450, 32
        %s1454 = sadd.s32 %s1452, %s1453
        %s1455 = smul.addr %s1454, 4
        %s1456 = scalar_lea.vmem %s7, %s1455
      $region64: #{tpu_custom_call.1} parent=59 // pred_fallthru
        _
    $region60: #{tpu_custom_call.1} parent=5 // pred_fallthru
      _
  $region6: #{tpu_custom_call.1} parent=0 // loop_footer
    %s17 = sadd.s32 1, %s13
  $region7: #{tpu_custom_call.1} parent=0 // loop_footer_branch
    %12 = sbr.rel target = $region3
  $region8: #{tpu_custom_call.1} parent=0 // loop_exit
    _

</llo_original>
